<compile_context>
chip_gen: v7x
topology: tpu7x:2x2x1
jax: 0.10.0
libtpu: 0.0.40
codegen_flags: <defaults>
</compile_context>

<pallas_src>
import jax
import jax.numpy as jnp
from jax.experimental import pallas as pl
from jax.experimental.pallas import tpu as pltpu


HIDDEN = 256
EMB = 128
A_PAD = 128   # one-hot lane width (>= num_actions, multiple of 128; keep at MXU depth)


def _round_up(x, m):
    return ((x + m - 1) // m) * m


def _choose_tile_n(n, target_steps=8, min_tile=256, max_tile=1024):
    """Row-tile size: multiple of 8, aims for ~target_steps grid steps, never > problem."""
    n8 = _round_up(max(n, 1), 8)
    t = _round_up(pl.cdiv(n8, target_steps), 8)
    t = min(max(t, min_tile), max_tile)
    return min(t, n8)


def _fwd_dynamics_kernel(x_ref, act_ref, w1_ref, b1_ref, w2_ref, b2_ref, o_ref):
    """relu([x | onehot(a)] @ W1 + b1) @ W2 + b2 — bf16 MXU inputs, f32 accumulation."""
    x = x_ref[...].astype(jnp.bfloat16)                          # (tn, 128)
    act = act_ref[...]                                           # (tn, 1) int32
    tn = x.shape[0]
    a_pad = w1_ref.shape[0] - EMB                                # 128

    # Fused one-hot: built on the VPU, concatenated along lanes (both halves are
    # 128-lane aligned, so this is vreg placement, no cross-lane shuffle).
    lanes = jax.lax.broadcasted_iota(jnp.int32, (tn, a_pad), 1)
    onehot = (act == lanes).astype(jnp.bfloat16)                 # (tn, 128)
    inp = jnp.concatenate([x, onehot], axis=1)                   # (tn, 256) bf16

    h = jnp.dot(inp, w1_ref[...], preferred_element_type=jnp.float32)   # (tn, 256)
    h = jnp.maximum(h + b1_ref[...], 0.0)                        # bias + ReLU (VPU)
    # NOTE: h is cast to bf16 for the second MXU pass (diverges slightly from the
    # f32 torch module; fine for RL use, checked loosely below).
    y = jnp.dot(h.astype(jnp.bfloat16), w2_ref[...],
                preferred_element_type=jnp.float32)              # (tn, 128)
    o_ref[...] = (y + b2_ref[...]).astype(o_ref.dtype)


def forward_dynamics_pallas(state_embedding, action, params, num_actions, tile_n=None):
    """state_embedding: (T, B, 128) f32; action: (T, B) int -> (T, B, 128) f32."""
    w1, b1, w2, b2 = params               # w1:(256,256) bf16, w2:(256,128) bf16, biases f32
    T, B, E = state_embedding.shape
    assert E == EMB and w1.shape == (EMB + A_PAD, HIDDEN) and w2.shape == (HIDDEN, EMB)

    N = T * B
    x = state_embedding.reshape(N, E)                    # view; no HBM copy
    act = action.reshape(N, 1).astype(jnp.int32)

    if tile_n is None:
        tile_n = _choose_tile_n(N)
    # Round any user-supplied tile to a multiple of 8 and cap by the problem size.
    tile_n = max(8, _round_up(min(tile_n, _round_up(N, 8)), 8))
    grid = (pl.cdiv(N, tile_n),)   # last block may be partial: Pallas masks OOB
                                   # loads/stores, so no jnp.pad / out[:N] passes.

    flops = 2 * N * (EMB + A_PAD) * HIDDEN + 2 * N * HIDDEN * EMB
    bytes_accessed = (x.size * 4 + act.size * 4 + (w1.size + w2.size) * 2
                      + (b1.size + b2.size) * 4 + N * EMB * 4)
    cost = pl.CostEstimate(flops=flops, transcendentals=0, bytes_accessed=bytes_accessed)

    out = pl.pallas_call(
        _fwd_dynamics_kernel,
        out_shape=jax.ShapeDtypeStruct((N, EMB), jnp.float32),
        grid_spec=pltpu.PrefetchScalarGridSpec(
            num_scalar_prefetch=0,
            grid=grid,
            in_specs=[
                pl.BlockSpec((tile_n, E), lambda i: (i, 0)),            # x tile (pipelined)
                pl.BlockSpec((tile_n, 1), lambda i: (i, 0)),            # action ids tile
                pl.BlockSpec((EMB + A_PAD, HIDDEN), lambda i: (0, 0)),  # W1 (VMEM-resident)
                pl.BlockSpec((1, HIDDEN), lambda i: (0, 0)),            # b1
                pl.BlockSpec((HIDDEN, EMB), lambda i: (0, 0)),          # W2 (VMEM-resident)
                pl.BlockSpec((1, EMB), lambda i: (0, 0)),               # b2
            ],
            out_specs=pl.BlockSpec((tile_n, EMB), lambda i: (i, 0)),
        ),
        compiler_params=pltpu.CompilerParams(dimension_semantics=("parallel",)),
        cost_estimate=cost,
    )(x, act, w1, b1.reshape(1, HIDDEN), w2, b2.reshape(1, EMB))

    return out.reshape(T, B, EMB)


def _orthogonal(key, out_dim, in_dim, gain):
    """Deterministic orthogonal init matching torch.nn.init.orthogonal_ semantics."""
    a = jax.random.normal(key, (out_dim, in_dim), dtype=jnp.float32)
    flat = a.T if out_dim < in_dim else a
    q, r = jnp.linalg.qr(flat)
    q = q * jnp.sign(jnp.diag(r))
    if out_dim < in_dim:
        q = q.T
    return gain * q  # (out_dim, in_dim)


def make_params(key, num_actions):
    assert num_actions <= A_PAD
    k1, k2 = jax.random.split(key)
    d_in = EMB + num_actions
    w1_torch = _orthogonal(k1, HIDDEN, d_in, jnp.sqrt(2.0))   # torch Linear weight (out, in)
    w2_torch = _orthogonal(k2, EMB, HIDDEN, 1.0)
    b1 = jnp.zeros((HIDDEN,), jnp.float32)                    # constant_(x, 0)
    b2 = jnp.zeros((EMB,), jnp.float32)

    # Kernel layout: single combined W1 of shape (128 + A_PAD, 256) in (in, out)
    # order, action rows zero-padded to 128 lanes, stored as bf16.
    w1 = jnp.zeros((EMB + A_PAD, HIDDEN), jnp.float32)
    w1 = w1.at[:EMB].set(w1_torch[:, :EMB].T)
    w1 = w1.at[EMB:EMB + num_actions].set(w1_torch[:, EMB:].T)
    w1 = w1.astype(jnp.bfloat16)
    w2 = w2_torch.T.astype(jnp.bfloat16)                      # (256, 128)
    return (w1, b1, w2, b2), (w1_torch, w2_torch)


if __name__ == "__main__":
    num_actions = 7
    T, B = 8, 40   # N = 320 rows -> 2 grid steps of 256 rows (last block partial, masked)

    key = jax.random.PRNGKey(0)
    k_params, k_state, k_act = jax.random.split(key, 3)

    params, (w1_torch, w2_torch) = make_params(k_params, num_actions)
    state_embedding = jax.random.normal(k_state, (T, B, EMB), dtype=jnp.float32)
    action = jax.random.randint(k_act, (T, B), 0, num_actions, dtype=jnp.int32)

    out = forward_dynamics_pallas(state_embedding, action, params, num_actions)
    out = jax.block_until_ready(out)
    assert out.shape == (T, B, EMB)

    # --- Check 1: precision-matched reference (same bf16 casts, f32 accumulation). ---
    w1, b1, w2, b2 = params
    xb = state_embedding.reshape(T * B, EMB).astype(jnp.bfloat16).astype(jnp.float32)
    oh = jax.nn.one_hot(action.reshape(-1), num_actions, dtype=jnp.float32)
    h = jnp.dot(xb, w1[:EMB].astype(jnp.float32), precision="highest")
    h = h + jnp.dot(oh, w1[EMB:EMB + num_actions].astype(jnp.float32), precision="highest")
    h = jnp.maximum(h + b1[None, :], 0.0)
    hb = h.astype(jnp.bfloat16).astype(jnp.float32)
    ref_matched = (jnp.dot(hb, w2.astype(jnp.float32), precision="highest")
                   + b2[None, :]).reshape(T, B, EMB)
    assert jnp.allclose(out, ref_matched, atol=1e-2, rtol=1e-2), "mismatch vs matched ref"

    # --- Check 2: original f32 PyTorch-module semantics (loose; bf16 weights/acts). ---
    inp = jnp.concatenate(
        [state_embedding, jax.nn.one_hot(action, num_actions, dtype=jnp.float32)], axis=2)
    ref_f32 = jnp.maximum(inp @ w1_torch.T, 0.0) @ w2_torch.T  # biases are zero
    assert jnp.allclose(out, ref_f32, atol=0.15, rtol=0.1), "mismatch vs f32 module ref"

    print("KERNEL_OK")
</pallas_src>

<mosaic_0001>
module attributes {stable_mosaic.version = 11 : i64} {
  func.func @_fwd_dynamics_kernel(%arg0: i32, %arg1: memref<256x128xf32, #tpu.memory_space<vmem>>, %arg2: memref<256x1xi32, #tpu.memory_space<vmem>>, %arg3: memref<256x256xbf16, #tpu.memory_space<vmem>>, %arg4: memref<1x256xf32, #tpu.memory_space<vmem>>, %arg5: memref<256x128xbf16, #tpu.memory_space<vmem>>, %arg6: memref<1x128xf32, #tpu.memory_space<vmem>>, %arg7: memref<256x128xf32, #tpu.memory_space<vmem>>) attributes {dimension_semantics = [#tpu.dimension_semantics<parallel>], iteration_bounds = array<i64: 2>, scalar_prefetch = 0 : i64, scratch_operands = 0 : i64, tpu.core_type = #tpu.core_type<tc>, window_params = [{transform_indices = @transform_0, window_bounds = array<i64: 256, 128>}, {transform_indices = @transform_1, window_bounds = array<i64: 256, 1>}, {pipeline_mode = #tpu.pipeline_mode<synchronous>, transform_indices = @transform_2, window_bounds = array<i64: 256, 256>}, {pipeline_mode = #tpu.pipeline_mode<synchronous>, transform_indices = @transform_3, window_bounds = array<i64: 1, 256>}, {pipeline_mode = #tpu.pipeline_mode<synchronous>, transform_indices = @transform_4, window_bounds = array<i64: 256, 128>}, {pipeline_mode = #tpu.pipeline_mode<synchronous>, transform_indices = @transform_5, window_bounds = array<i64: 1, 128>}, {transform_indices = @transform_6, window_bounds = array<i64: 256, 128>}]} {
    %c0 = arith.constant 0 : index
    %c0_0 = arith.constant 0 : index
    %0 = vector.load %arg1[%c0, %c0_0] : memref<256x128xf32, #tpu.memory_space<vmem>>, vector<256x128xf32>
    %1 = arith.truncf %0 : vector<256x128xf32> to vector<256x128xbf16>
    %c0_1 = arith.constant 0 : index
    %c0_2 = arith.constant 0 : index
    %2 = vector.load %arg2[%c0_1, %c0_2] : memref<256x1xi32, #tpu.memory_space<vmem>>, vector<256x1xi32>
    %3 = tpu.iota {dimensions = array<i32: 1>} : vector<256x128xi32>
    %4 = vector.broadcast %2 : vector<256x1xi32> to vector<256x128xi32>
    %5 = arith.cmpi eq, %4, %3 : vector<256x128xi32>
    %6 = arith.extui %5 : vector<256x128xi1> to vector<256x128xi32>
    %7 = arith.sitofp %6 : vector<256x128xi32> to vector<256x128xf32>
    %8 = arith.truncf %7 : vector<256x128xf32> to vector<256x128xbf16>
    %9 = tpu.concatenate %1, %8 in 1 : vector<256x128xbf16>, vector<256x128xbf16> -> vector<256x256xbf16>
    %c0_3 = arith.constant 0 : index
    %c0_4 = arith.constant 0 : index
    %10 = vector.load %arg3[%c0_3, %c0_4] : memref<256x256xbf16, #tpu.memory_space<vmem>>, vector<256x256xbf16>
    %cst = arith.constant dense<0.000000e+00> : vector<256x256xf32>
    %11 = tpu.matmul %9, %10, %cst {dimension_numbers = #tpu.dot_dimension_numbers<[1], [0], [0], [1], [0, 0, 1, 1], [], []>} : vector<256x256xbf16>, vector<256x256xbf16>, vector<256x256xf32> -> vector<256x256xf32>
    %c0_5 = arith.constant 0 : index
    %c0_6 = arith.constant 0 : index
    %12 = vector.load %arg4[%c0_5, %c0_6] : memref<1x256xf32, #tpu.memory_space<vmem>>, vector<1x256xf32>
    %13 = vector.broadcast %12 : vector<1x256xf32> to vector<256x256xf32>
    %14 = arith.addf %11, %13 : vector<256x256xf32>
    %cst_7 = arith.constant 0.000000e+00 : f32
    %15 = vector.broadcast %cst_7 : f32 to vector<256x256xf32>
    %16 = arith.maximumf %14, %15 : vector<256x256xf32>
    %17 = arith.truncf %16 : vector<256x256xf32> to vector<256x256xbf16>
    %c0_8 = arith.constant 0 : index
    %c0_9 = arith.constant 0 : index
    %18 = vector.load %arg5[%c0_8, %c0_9] : memref<256x128xbf16, #tpu.memory_space<vmem>>, vector<256x128xbf16>
    %cst_10 = arith.constant dense<0.000000e+00> : vector<256x128xf32>
    %19 = tpu.matmul %17, %18, %cst_10 {dimension_numbers = #tpu.dot_dimension_numbers<[1], [0], [0], [1], [0, 0, 1, 1], [], []>} : vector<256x256xbf16>, vector<256x128xbf16>, vector<256x128xf32> -> vector<256x128xf32>
    %c0_11 = arith.constant 0 : index
    %c0_12 = arith.constant 0 : index
    %20 = vector.load %arg6[%c0_11, %c0_12] : memref<1x128xf32, #tpu.memory_space<vmem>>, vector<1x128xf32>
    %21 = vector.broadcast %20 : vector<1x128xf32> to vector<256x128xf32>
    %22 = arith.addf %19, %21 : vector<256x128xf32>
    %c0_13 = arith.constant 0 : index
    %c0_14 = arith.constant 0 : index
    %23 = vector.load %arg7[%c0_13, %c0_14] : memref<256x128xf32, #tpu.memory_space<vmem>>, vector<256x128xf32>
    tpu.vector_store %arg7[%c0_13, %c0_14], %22 {strides = array<i32>} : memref<256x128xf32, #tpu.memory_space<vmem>>, vector<256x128xf32>,
    return
  }
  func.func @transform_0(%arg0: i32) -> (i32, i32) {
    %c0_i32 = arith.constant 0 : i32
    %c0_i32_0 = arith.constant 0 : i32
    return %arg0, %c0_i32 : i32, i32
  }
  func.func @transform_1(%arg0: i32) -> (i32, i32) {
    %c0_i32 = arith.constant 0 : i32
    %c0_i32_0 = arith.constant 0 : i32
    return %arg0, %c0_i32 : i32, i32
  }
  func.func @transform_2(%arg0: i32) -> (i32, i32) {
    %c0_i32 = arith.constant 0 : i32
    %c0_i32_0 = arith.constant 0 : i32
    %c0_i32_1 = arith.constant 0 : i32
    return %c0_i32, %c0_i32_0 : i32, i32
  }
  func.func @transform_3(%arg0: i32) -> (i32, i32) {
    %c0_i32 = arith.constant 0 : i32
    %c0_i32_0 = arith.constant 0 : i32
    %c0_i32_1 = arith.constant 0 : i32
    return %c0_i32, %c0_i32_0 : i32, i32
  }
  func.func @transform_4(%arg0: i32) -> (i32, i32) {
    %c0_i32 = arith.constant 0 : i32
    %c0_i32_0 = arith.constant 0 : i32
    %c0_i32_1 = arith.constant 0 : i32
    return %c0_i32, %c0_i32_0 : i32, i32
  }
  func.func @transform_5(%arg0: i32) -> (i32, i32) {
    %c0_i32 = arith.constant 0 : i32
    %c0_i32_0 = arith.constant 0 : i32
    %c0_i32_1 = arith.constant 0 : i32
    return %c0_i32, %c0_i32_0 : i32, i32
  }
  func.func @transform_6(%arg0: i32) -> (i32, i32) {
    %c0_i32 = arith.constant 0 : i32
    %c0_i32_0 = arith.constant 0 : i32
    return %arg0, %c0_i32 : i32, i32
  }
}

</mosaic_0001>

<llo_original>
// kernel: tpu_custom_call.1
$region0: #{tpu_custom_call.1}
  #allocation0 [shape = 'u32[]', space=smem, size = 0x4, offset = 0x4, fixed_abs, tag = 'smem constant byte address 0x4 - core index']
  #allocation1 [shape = 'u32[144,128]{1,0:T(1,128)}', space=vmem, size = 0x12000, scoped, tag = 'internal scratch']
  %s0 = inlined_call_operand.vmem [shape: f32[320,128], index: 0, kind: input, shape index: {}]
  %s1 = inlined_call_operand.vmem [shape: s32[320,1], index: 1, kind: input, shape index: {}]
  %s2 = inlined_call_operand.hbm [shape: bf16[256,256], index: 2, kind: input, shape index: {}]
  %s3 = inlined_call_operand.vmem [shape: f32[1,256], index: 3, kind: input, shape index: {}]
  %s4 = inlined_call_operand.hbm [shape: bf16[256,128], index: 4, kind: input, shape index: {}]
  %s5 = inlined_call_operand.vmem [shape: f32[1,128], index: 5, kind: input, shape index: {}]
  %s6 = inlined_call_operand.hbm [shape: f32[320,128], index: 6, kind: output, shape index: {}]
  %s7 = sld [smem:[#allocation0]]
  $region65: #{tpu_custom_call.1} parent=0
    _
  %s9 = ssub.s32 1, %s7
  %s10 = scalar_select 0, %s9, %s7
  $region1: #{tpu_custom_call.1} parent=0
    #allocation2 [shape = 'u8[131072]{0}', space=vmem, size = 0x20000, scoped, tag = 'input window, operand 2, single buffered']
    #allocation3 [shape = 's32[2]{0}', space=sflag, size = 0x8, scoped, tag = 'scoped memory for tpu_custom_call.1']
    #allocation4 [shape = 's32[2]{0}', space=sflag, size = 0x8, scoped, tag = 'scoped memory for tpu_custom_call.1']
    #allocation5 [shape = 'u8[65536]{0}', space=vmem, size = 0x10000, scoped, tag = 'input window, operand 4, single buffered']
    #allocation6 [shape = 's32[1]{0}', space=sflag, size = 0x4, scoped, tag = 'scoped memory for tpu_custom_call.1']
    #allocation7 [shape = 'u8[262144]{0}', space=vmem, size = 0x40000, scoped, tag = 'output window, operand 0']
    %11 = vsyncpa [#allocation3], 0
    %12 = vsyncpa [#allocation6], 0
    %13 = vsyncpa [#allocation4], 0
    %s14 = scalar_lea.sflag [#allocation4], 1
    %15 = vsyncpa %s14, 0
    loop: start=0, step=1, limit=4
    $region2: #{tpu_custom_call.1} parent=1 // loop_pre_header
      _
    $region3: #{tpu_custom_call.1} parent=1 // loop_header
      %s17 = sphi 0, %s21
      %p18 = scmp.ge.s32.totalorder %s17, 4
      %s27 = sphi 0, %s29
      %s30 = sphi 0, %s27
      %s31 = sphi 0, %s30
      %s47 = sphi 0, %s31
      %s53 = sphi 0, %s55
      %s56 = sphi 0, %s53
      %s57 = sphi 0, %s56
      %s73 = sphi 0, %s57
      %s77 = sphi 0, %s77
      %s79 = sphi 0, %s77
      %s80 = sphi 0, %s79
      %s94 = sphi 0, %s80
      %s98 = sphi 0, %s98
      %s100 = sphi 0, %s98
      %s101 = sphi 0, %s100
      %s115 = sphi 0, %s101
      %s119 = sphi 0, %s119
      %s121 = sphi 0, %s119
      %s122 = sphi 0, %s121
      %s136 = sphi 0, %s122
      %s140 = sphi 0, %s140
      %s142 = sphi 0, %s140
      %s143 = sphi 0, %s142
      %s157 = sphi 0, %s143
      %s163 = sphi 0, %s165
      %s166 = sphi 0, %s163
      %s167 = sphi 0, %s166
      %s183 = sphi 0, %s167
    $region4: #{tpu_custom_call.1} parent=1 // loop_header_branch
      %20 = sbr.rel (%p18) target = $region8
    $region5: #{tpu_custom_call.1} parent=1 // loop_body
      %s22 = ssub.s32 %s17, 1
      %s23 = ssub.s32 %s17, 2
      %s24 = sadd.s32 %s17, 1
      %s25 = ssub.s32 %s17, %s24
      %p26 = scmp.eq.s32.totalorder %s25, 0
      %s28 = sadd.s32 %s27, 1
      %s29 = scalar_select %p26, %s27, %s28
      %p32 = pneg %p26
      %p33 = scmp.eq.s32.totalorder %s17, 1
      %p34 = por %p32, %p33
      %p35 = scmp.ne.s32.totalorder %s27, %s30
      %p36 = scmp.eq.s32.totalorder %s17, 0
      %p37 = por %p35, %p36
      %p38 = scmp.ne.s32.totalorder %s27, %s30
      %p39 = scmp.eq.s32.totalorder %s22, 1
      %p40 = por %p38, %p39
      %p41 = scmp.ne.s32.totalorder %s30, %s31
      %p42 = scmp.eq.s32.totalorder %s22, 0
      %p43 = por %p41, %p42
      %p44 = scmp.ne.s32.totalorder %s30, %s31
      %p45 = scmp.eq.s32.totalorder %s23, 1
      %p46 = por %p44, %p45
      %p48 = scmp.ne.s32.totalorder %s31, %s47
      %p49 = scmp.eq.s32.totalorder %s23, 0
      %p50 = por %p48, %p49
      %s51 = ssub.s32 %s17, %s24
      %p52 = scmp.eq.s32.totalorder %s51, 0
      %s54 = sadd.s32 %s53, 1
      %s55 = scalar_select %p52, %s53, %s54
      %p58 = pneg %p52
      %p59 = scmp.eq.s32.totalorder %s17, 1
      %p60 = por %p58, %p59
      %p61 = scmp.ne.s32.totalorder %s53, %s56
      %p62 = scmp.eq.s32.totalorder %s17, 0
      %p63 = por %p61, %p62
      %p64 = scmp.ne.s32.totalorder %s53, %s56
      %p65 = scmp.eq.s32.totalorder %s22, 1
      %p66 = por %p64, %p65
      %p67 = scmp.ne.s32.totalorder %s56, %s57
      %p68 = scmp.eq.s32.totalorder %s22, 0
      %p69 = por %p67, %p68
      %p70 = scmp.ne.s32.totalorder %s56, %s57
      %p71 = scmp.eq.s32.totalorder %s23, 1
      %p72 = por %p70, %p71
      %p74 = scmp.ne.s32.totalorder %s57, %s73
      %p75 = scmp.eq.s32.totalorder %s23, 0
      %p76 = por %p74, %p75
      %s78 = sadd.s32 %s77, 1
      %p81 = scmp.eq.s32.totalorder %s17, 1
      %p82 = scmp.ne.s32.totalorder %s77, %s79
      %p83 = scmp.eq.s32.totalorder %s17, 0
      %p84 = por %p82, %p83
      %p85 = scmp.ne.s32.totalorder %s77, %s79
      %p86 = scmp.eq.s32.totalorder %s22, 1
      %p87 = por %p85, %p86
      %p88 = scmp.ne.s32.totalorder %s79, %s80
      %p89 = scmp.eq.s32.totalorder %s22, 0
      %p90 = por %p88, %p89
      %p91 = scmp.ne.s32.totalorder %s79, %s80
      %p92 = scmp.eq.s32.totalorder %s23, 1
      %p93 = por %p91, %p92
      %p95 = scmp.ne.s32.totalorder %s80, %s94
      %p96 = scmp.eq.s32.totalorder %s23, 0
      %p97 = por %p95, %p96
      %s99 = sadd.s32 %s98, 1
      %p102 = scmp.eq.s32.totalorder %s17, 1
      %p103 = scmp.ne.s32.totalorder %s98, %s100
      %p104 = scmp.eq.s32.totalorder %s17, 0
      %p105 = por %p103, %p104
      %p106 = scmp.ne.s32.totalorder %s98, %s100
      %p107 = scmp.eq.s32.totalorder %s22, 1
      %p108 = por %p106, %p107
      %p109 = scmp.ne.s32.totalorder %s100, %s101
      %p110 = scmp.eq.s32.totalorder %s22, 0
      %p111 = por %p109, %p110
      %p112 = scmp.ne.s32.totalorder %s100, %s101
      %p113 = scmp.eq.s32.totalorder %s23, 1
      %p114 = por %p112, %p113
      %p116 = scmp.ne.s32.totalorder %s101, %s115
      %p117 = scmp.eq.s32.totalorder %s23, 0
      %p118 = por %p116, %p117
      %s120 = sadd.s32 %s119, 1
      %p123 = scmp.eq.s32.totalorder %s17, 1
      %p124 = scmp.ne.s32.totalorder %s119, %s121
      %p125 = scmp.eq.s32.totalorder %s17, 0
      %p126 = por %p124, %p125
      %p127 = scmp.ne.s32.totalorder %s119, %s121
      %p128 = scmp.eq.s32.totalorder %s22, 1
      %p129 = por %p127, %p128
      %p130 = scmp.ne.s32.totalorder %s121, %s122
      %p131 = scmp.eq.s32.totalorder %s22, 0
      %p132 = por %p130, %p131
      %p133 = scmp.ne.s32.totalorder %s121, %s122
      %p134 = scmp.eq.s32.totalorder %s23, 1
      %p135 = por %p133, %p134
      %p137 = scmp.ne.s32.totalorder %s122, %s136
      %p138 = scmp.eq.s32.totalorder %s23, 0
      %p139 = por %p137, %p138
      %s141 = sadd.s32 %s140, 1
      %p144 = scmp.eq.s32.totalorder %s17, 1
      %p145 = scmp.ne.s32.totalorder %s140, %s142
      %p146 = scmp.eq.s32.totalorder %s17, 0
      %p147 = por %p145, %p146
      %p148 = scmp.ne.s32.totalorder %s140, %s142
      %p149 = scmp.eq.s32.totalorder %s22, 1
      %p150 = por %p148, %p149
      %p151 = scmp.ne.s32.totalorder %s142, %s143
      %p152 = scmp.eq.s32.totalorder %s22, 0
      %p153 = por %p151, %p152
      %p154 = scmp.ne.s32.totalorder %s142, %s143
      %p155 = scmp.eq.s32.totalorder %s23, 1
      %p156 = por %p154, %p155
      %p158 = scmp.ne.s32.totalorder %s143, %s157
      %p159 = scmp.eq.s32.totalorder %s23, 0
      %p160 = por %p158, %p159
      %s161 = ssub.s32 %s17, %s24
      %p162 = scmp.eq.s32.totalorder %s161, 0
      %s164 = sadd.s32 %s163, 1
      %s165 = scalar_select %p162, %s163, %s164
      %p168 = pneg %p162
      %p169 = scmp.eq.s32.totalorder %s17, 1
      %p170 = por %p168, %p169
      %p171 = scmp.ne.s32.totalorder %s163, %s166
      %p172 = scmp.eq.s32.totalorder %s17, 0
      %p173 = por %p171, %p172
      %p174 = scmp.ne.s32.totalorder %s163, %s166
      %p175 = scmp.eq.s32.totalorder %s22, 1
      %p176 = por %p174, %p175
      %p177 = scmp.ne.s32.totalorder %s166, %s167
      %p178 = scmp.eq.s32.totalorder %s22, 0
      %p179 = por %p177, %p178
      %p180 = scmp.ne.s32.totalorder %s166, %s167
      %p181 = scmp.eq.s32.totalorder %s23, 1
      %p182 = por %p180, %p181
      %p184 = scmp.ne.s32.totalorder %s167, %s183
      %p185 = scmp.eq.s32.totalorder %s23, 0
      %p186 = por %p184, %p185
      %p187 = scmp.le.s32.totalorder 1, %s17
      %p188 = scmp.lt.s32.totalorder %s17, 3
      %p189 = pnand %p187, %p188
      %p190 = pneg %p189
      // Predicated region
      $region9: #{tpu_custom_call.1} parent=5 // pred_check
        _
      $region10: #{tpu_custom_call.1} parent=5 // pred_check_branch
        %192 = sbr.rel (%p189) target = $region12
      $region11: #{tpu_custom_call.1} parent=5 // pred_region
        %s193 = ssub.s32 %s17, 1
        // Predicated region
        $region13: #{tpu_custom_call.1} parent=11 // pred_check
          %p194 = pneg %p90
        $region14: #{tpu_custom_call.1} parent=11 // pred_check_branch
          %196 = sbr.rel (%p194) target = $region16
        $region15: #{tpu_custom_call.1} parent=11 // pred_region
          %s198 = ssub.s32 4096, 4096
          %199 = vsyncadd [#allocation3], %s198
          %s200 = sshll.u32 [#allocation2], 4
          %s201 = int_to_ptr.vmem [resolvable:$true] %s200
          %206 = dma.hbm_to_vmem [thread:$0]  %s2, 4096, %s201, [#allocation3], 128, 128, 8
        $region16: #{tpu_custom_call.1} parent=11 // pred_fallthru
          _
        // Predicated region
        $region17: #{tpu_custom_call.1} parent=11 // pred_check
          %p207 = pneg %p111
        $region18: #{tpu_custom_call.1} parent=11 // pred_check_branch
          %209 = sbr.rel (%p207) target = $region20
        $region19: #{tpu_custom_call.1} parent=11 // pred_region
          _
        $region20: #{tpu_custom_call.1} parent=11 // pred_fallthru
          _
        // Predicated region
        $region21: #{tpu_custom_call.1} parent=11 // pred_check
          %p210 = pneg %p132
        $region22: #{tpu_custom_call.1} parent=11 // pred_check_branch
          %212 = sbr.rel (%p210) target = $region24
        $region23: #{tpu_custom_call.1} parent=11 // pred_region
          %s214 = ssub.s32 2048, 2048
          %215 = vsyncadd [#allocation6], %s214
          %s216 = sshll.u32 [#allocation5], 4
          %s217 = int_to_ptr.vmem [resolvable:$true] %s216
          %222 = dma.hbm_to_vmem [thread:$0]  %s4, 2048, %s217, [#allocation6], 64, 64, 4
        $region24: #{tpu_custom_call.1} parent=11 // pred_fallthru
          _
        // Predicated region
        $region25: #{tpu_custom_call.1} parent=11 // pred_check
          %p223 = pneg %p153
        $region26: #{tpu_custom_call.1} parent=11 // pred_check_branch
          %225 = sbr.rel (%p223) target = $region28
        $region27: #{tpu_custom_call.1} parent=11 // pred_region
          _
        $region28: #{tpu_custom_call.1} parent=11 // pred_fallthru
          _
      $region12: #{tpu_custom_call.1} parent=5 // pred_fallthru
        _
      %p226 = scmp.lt.s32.totalorder %s17, 2
      // Predicated region
      $region29: #{tpu_custom_call.1} parent=5 // pred_check
        %p227 = pneg %p226
      $region30: #{tpu_custom_call.1} parent=5 // pred_check_branch
        %229 = sbr.rel (%p227) target = $region32
      $region31: #{tpu_custom_call.1} parent=5 // pred_region
        // Predicated region
        $region33: #{tpu_custom_call.1} parent=31 // pred_check
          %p230 = pneg %p37
        $region34: #{tpu_custom_call.1} parent=31 // pred_check_branch
          %232 = sbr.rel (%p230) target = $region36
        $region35: #{tpu_custom_call.1} parent=31 // pred_region
          %s233 = smul.u32 32, %s17
          %s234 = ssub.s32 40, %s233
          %p235 = scmp.lt.s32.totalorder %s234, 32
          %s236 = scalar_select %p235, %s234, 32
          %s237 = smul.u32 128, %s236
          %p238 = scmp.lt.s32.totalorder %s233, 39
          %s239 = scalar_select %p238, %s233, 39
          %s240 = smul.addr %s239, 8
          %s241 = scalar_lea.vmem %s0, %s240
          %s242 = smul.u32 32, %s17
          %s243 = ssub.s32 40, %s242
          %p244 = scmp.lt.s32.totalorder %s243, 32
          %s245 = scalar_select %p244, %s243, 32
          %s246 = smul.u32 128, %s245
        $region36: #{tpu_custom_call.1} parent=31 // pred_fallthru
          _
        // Predicated region
        $region37: #{tpu_custom_call.1} parent=31 // pred_check
          %p247 = pneg %p63
        $region38: #{tpu_custom_call.1} parent=31 // pred_check_branch
          %249 = sbr.rel (%p247) target = $region40
        $region39: #{tpu_custom_call.1} parent=31 // pred_region
          %s250 = smul.u32 32, %s17
          %s251 = ssub.s32 40, %s250
          %p252 = scmp.lt.s32.totalorder %s251, 32
          %s253 = scalar_select %p252, %s251, 32
          %s254 = smul.u32 128, %s253
          %p255 = scmp.lt.s32.totalorder %s250, 39
          %s256 = scalar_select %p255, %s250, 39
          %s257 = smul.addr %s256, 8
          %s258 = scalar_lea.vmem %s1, %s257
          %s259 = smul.u32 32, %s17
          %s260 = ssub.s32 40, %s259
          %p261 = scmp.lt.s32.totalorder %s260, 32
          %s262 = scalar_select %p261, %s260, 32
          %s263 = smul.u32 128, %s262
        $region40: #{tpu_custom_call.1} parent=31 // pred_fallthru
          _
      $region32: #{tpu_custom_call.1} parent=5 // pred_fallthru
        _
      %p264 = scmp.le.s32.totalorder 1, %s17
      %p265 = scmp.lt.s32.totalorder %s17, 3
      %p266 = pnand %p264, %p265
      %p267 = pneg %p266
      // Predicated region
      $region41: #{tpu_custom_call.1} parent=5 // pred_check
        _
      $region42: #{tpu_custom_call.1} parent=5 // pred_check_branch
        %269 = sbr.rel (%p266) target = $region44
      $region43: #{tpu_custom_call.1} parent=5 // pred_region
        %s270 = ssub.s32 %s17, 1
        // Predicated region
        $region45: #{tpu_custom_call.1} parent=43 // pred_check
          %p271 = pneg %p90
        $region46: #{tpu_custom_call.1} parent=43 // pred_check_branch
          %273 = sbr.rel (%p271) target = $region48
        $region47: #{tpu_custom_call.1} parent=43 // pred_region
          %274 = dma.done [#allocation3], 4096
        $region48: #{tpu_custom_call.1} parent=43 // pred_fallthru
          _
        // Predicated region
        $region49: #{tpu_custom_call.1} parent=43 // pred_check
          %p275 = pneg %p132
        $region50: #{tpu_custom_call.1} parent=43 // pred_check_branch
          %277 = sbr.rel (%p275) target = $region52
        $region51: #{tpu_custom_call.1} parent=43 // pred_region
          %278 = dma.done [#allocation6], 2048
        $region52: #{tpu_custom_call.1} parent=43 // pred_fallthru
          _
        %s279 = smul.u32 32, %s22
        %s280 = ssub.s32 40, %s279
        %p281 = scmp.lt.s32.totalorder %s280, 32
        %s282 = scalar_select %p281, %s280, 32
        %s283 = smul.u32 128, %s282
        %p284 = scmp.lt.s32.totalorder %s279, 39
        %s285 = scalar_select %p284, %s279, 39
        %s286 = smul.addr %s285, 8
        %s287 = scalar_lea.vmem %s0, %s286
        %p288 = pneg %p43
        %p289 = pneg %p40
        %s290 = smul.u32 32, %s22
        %s291 = ssub.s32 40, %s290
        %p292 = scmp.lt.s32.totalorder %s291, 32
        %s293 = scalar_select %p292, %s291, 32
        %s294 = smul.u32 128, %s293
        %p295 = scmp.lt.s32.totalorder %s290, 39
        %s296 = scalar_select %p295, %s290, 39
        %s297 = smul.addr %s296, 8
        %s298 = scalar_lea.vmem %s1, %s297
        %p299 = pneg %p69
        %p300 = pneg %p66
        %p301 = pneg %p90
        %p302 = pneg %p87
        %p303 = pneg %p111
        %p304 = pneg %p108
        %p305 = pneg %p132
        %p306 = pneg %p129
        %p307 = pneg %p153
        %p308 = pneg %p150
        %p309 = pneg %p179
        %p310 = pneg %p176
        %s311 = sand.u32 %s166, 1
        %s312 = scalar_lea.sflag [#allocation4], %s311
        %s313 = sand.u32 %s166, 1
        %s314 = smul.addr %s313, 256
        %s315 = scalar_lea.vmem [#allocation7], %s314
        %s316 = smul.u32 32, %s22
        %s317 = ssub.s32 40, %s316
        %p318 = scmp.lt.s32.totalorder %s317, 32
        %s319 = scalar_select %p318, %s317, 32
        %s320 = smul.u32 128, %s319
        %p321 = scmp.lt.s32.totalorder %s316, 39
        %s322 = scalar_select %p321, %s316, 39
        %s323 = smul.addr %s322, 8
        %s324 = scalar_lea.vmem %s0, %s323
        %s325 = smul.u32 32, %s22
        %s326 = ssub.s32 40, %s325
        %p327 = scmp.lt.s32.totalorder %s326, 32
        %s328 = scalar_select %p327, %s326, 32
        %s329 = smul.u32 128, %s328
        %s330 = smul.u32 32, %s22
        %s331 = ssub.s32 40, %s330
        %p332 = scmp.lt.s32.totalorder %s331, 32
        %s333 = scalar_select %p332, %s331, 32
        %s334 = smul.u32 128, %s333
        %p335 = scmp.lt.s32.totalorder %s330, 39
        %s336 = scalar_select %p335, %s330, 39
        %s337 = smul.addr %s336, 8
        %s338 = scalar_lea.vmem %s1, %s337
        %s339 = smul.u32 32, %s22
        %s340 = ssub.s32 40, %s339
        %p341 = scmp.lt.s32.totalorder %s340, 32
        %s342 = scalar_select %p341, %s340, 32
        %s343 = smul.u32 128, %s342
        %s344 = smul.u32 32, %s22
        %s345 = ssub.s32 40, %s344
        %p346 = scmp.lt.s32.totalorder %s345, 32
        %s347 = scalar_select %p346, %s345, 32
        %s348 = smul.u32 128, %s347
        %v350 = vld [vmem:[%s324] sm:$0xff]
        %v351 = vld [vmem:[%s324 + $0x8] sm:$0xff]
        %v352 = vld [vmem:[%s324 + $0x10] sm:$0xff]
        %v353 = vld [vmem:[%s324 + $0x18] sm:$0xff]
        %v354 = vld [vmem:[%s324 + $0x20] sm:$0xff]
        %v355 = vld [vmem:[%s324 + $0x28] sm:$0xff]
        %v356 = vld [vmem:[%s324 + $0x30] sm:$0xff]
        %v357 = vld [vmem:[%s324 + $0x38] sm:$0xff]
        %v358 = vld [vmem:[%s324 + $0x40] sm:$0xff]
        %v359 = vld [vmem:[%s324 + $0x48] sm:$0xff]
        %v360 = vld [vmem:[%s324 + $0x50] sm:$0xff]
        %v361 = vld [vmem:[%s324 + $0x58] sm:$0xff]
        %v362 = vld [vmem:[%s324 + $0x60] sm:$0xff]
        %v363 = vld [vmem:[%s324 + $0x68] sm:$0xff]
        %v364 = vld [vmem:[%s324 + $0x70] sm:$0xff]
        %v365 = vld [vmem:[%s324 + $0x78] sm:$0xff]
        %v366 = vld [vmem:[%s324 + $0x80] sm:$0xff]
        %v367 = vld [vmem:[%s324 + $0x88] sm:$0xff]
        %v368 = vld [vmem:[%s324 + $0x90] sm:$0xff]
        %v369 = vld [vmem:[%s324 + $0x98] sm:$0xff]
        %v370 = vld [vmem:[%s324 + $0xa0] sm:$0xff]
        %v371 = vld [vmem:[%s324 + $0xa8] sm:$0xff]
        %v372 = vld [vmem:[%s324 + $0xb0] sm:$0xff]
        %v373 = vld [vmem:[%s324 + $0xb8] sm:$0xff]
        %v374 = vld [vmem:[%s324 + $0xc0] sm:$0xff]
        %v375 = vld [vmem:[%s324 + $0xc8] sm:$0xff]
        %v376 = vld [vmem:[%s324 + $0xd0] sm:$0xff]
        %v377 = vld [vmem:[%s324 + $0xd8] sm:$0xff]
        %v378 = vld [vmem:[%s324 + $0xe0] sm:$0xff]
        %v379 = vld [vmem:[%s324 + $0xe8] sm:$0xff]
        %v380 = vld [vmem:[%s324 + $0xf0] sm:$0xff]
        %v381 = vld [vmem:[%s324 + $0xf8] sm:$0xff]
        %v382 = vpack.c.bf16 %v351, %v350
        %v383 = vpack.c.bf16 %v353, %v352
        %v384 = vpack.c.bf16 %v355, %v354
        %v385 = vpack.c.bf16 %v357, %v356
        %v386 = vpack.c.bf16 %v359, %v358
        %v387 = vpack.c.bf16 %v361, %v360
        %v388 = vpack.c.bf16 %v363, %v362
        %v389 = vpack.c.bf16 %v365, %v364
        %v390 = vpack.c.bf16 %v367, %v366
        %v391 = vpack.c.bf16 %v369, %v368
        %v392 = vpack.c.bf16 %v371, %v370
        %v393 = vpack.c.bf16 %v373, %v372
        %v394 = vpack.c.bf16 %v375, %v374
        %v395 = vpack.c.bf16 %v377, %v376
        %v396 = vpack.c.bf16 %v379, %v378
        %v397 = vpack.c.bf16 %v381, %v380
        %v398 = vld [vmem:[%s338] sm:$0xff]
        %v399 = vld [vmem:[%s338 + $0x8] sm:$0xff]
        %v400 = vld [vmem:[%s338 + $0x10] sm:$0xff]
        %v401 = vld [vmem:[%s338 + $0x18] sm:$0xff]
        %v402 = vld [vmem:[%s338 + $0x20] sm:$0xff]
        %v403 = vld [vmem:[%s338 + $0x28] sm:$0xff]
        %v404 = vld [vmem:[%s338 + $0x30] sm:$0xff]
        %v405 = vld [vmem:[%s338 + $0x38] sm:$0xff]
        %v406 = vld [vmem:[%s338 + $0x40] sm:$0xff]
        %v407 = vld [vmem:[%s338 + $0x48] sm:$0xff]
        %v408 = vld [vmem:[%s338 + $0x50] sm:$0xff]
        %v409 = vld [vmem:[%s338 + $0x58] sm:$0xff]
        %v410 = vld [vmem:[%s338 + $0x60] sm:$0xff]
        %v411 = vld [vmem:[%s338 + $0x68] sm:$0xff]
        %v412 = vld [vmem:[%s338 + $0x70] sm:$0xff]
        %v413 = vld [vmem:[%s338 + $0x78] sm:$0xff]
        %v414 = vld [vmem:[%s338 + $0x80] sm:$0xff]
        %v415 = vld [vmem:[%s338 + $0x88] sm:$0xff]
        %v416 = vld [vmem:[%s338 + $0x90] sm:$0xff]
        %v417 = vld [vmem:[%s338 + $0x98] sm:$0xff]
        %v418 = vld [vmem:[%s338 + $0xa0] sm:$0xff]
        %v419 = vld [vmem:[%s338 + $0xa8] sm:$0xff]
        %v420 = vld [vmem:[%s338 + $0xb0] sm:$0xff]
        %v421 = vld [vmem:[%s338 + $0xb8] sm:$0xff]
        %v422 = vld [vmem:[%s338 + $0xc0] sm:$0xff]
        %v423 = vld [vmem:[%s338 + $0xc8] sm:$0xff]
        %v424 = vld [vmem:[%s338 + $0xd0] sm:$0xff]
        %v425 = vld [vmem:[%s338 + $0xd8] sm:$0xff]
        %v426 = vld [vmem:[%s338 + $0xe0] sm:$0xff]
        %v427 = vld [vmem:[%s338 + $0xe8] sm:$0xff]
        %v428 = vld [vmem:[%s338 + $0xf0] sm:$0xff]
        %v429 = vld [vmem:[%s338 + $0xf8] sm:$0xff]
        %v430 = vlaneseq
        %v431 = vand.u32 %v430, 127
        %432 = vset.pattern.permute.xlu0 0
        %433 = vperm.xlu0 %432, %v398
        %v434 = vpop.permute.xlu0 %433
        %435 = vset.pattern.permute.xlu0 0
        %436 = vperm.xlu0 %435, %v399
        %v437 = vpop.permute.xlu0 %436
        %438 = vset.pattern.permute.xlu0 0
        %439 = vperm.xlu0 %438, %v400
        %v440 = vpop.permute.xlu0 %439
        %441 = vset.pattern.permute.xlu0 0
        %442 = vperm.xlu0 %441, %v401
        %v443 = vpop.permute.xlu0 %442
        %444 = vset.pattern.permute.xlu0 0
        %445 = vperm.xlu0 %444, %v402
        %v446 = vpop.permute.xlu0 %445
        %447 = vset.pattern.permute.xlu0 0
        %448 = vperm.xlu0 %447, %v403
        %v449 = vpop.permute.xlu0 %448
        %450 = vset.pattern.permute.xlu0 0
        %451 = vperm.xlu0 %450, %v404
        %v452 = vpop.permute.xlu0 %451
        %453 = vset.pattern.permute.xlu0 0
        %454 = vperm.xlu0 %453, %v405
        %v455 = vpop.permute.xlu0 %454
        %456 = vset.pattern.permute.xlu0 0
        %457 = vperm.xlu0 %456, %v406
        %v458 = vpop.permute.xlu0 %457
        %459 = vset.pattern.permute.xlu0 0
        %460 = vperm.xlu0 %459, %v407
        %v461 = vpop.permute.xlu0 %460
        %462 = vset.pattern.permute.xlu0 0
        %463 = vperm.xlu0 %462, %v408
        %v464 = vpop.permute.xlu0 %463
        %465 = vset.pattern.permute.xlu0 0
        %466 = vperm.xlu0 %465, %v409
        %v467 = vpop.permute.xlu0 %466
        %468 = vset.pattern.permute.xlu0 0
        %469 = vperm.xlu0 %468, %v410
        %v470 = vpop.permute.xlu0 %469
        %471 = vset.pattern.permute.xlu0 0
        %472 = vperm.xlu0 %471, %v411
        %v473 = vpop.permute.xlu0 %472
        %474 = vset.pattern.permute.xlu0 0
        %475 = vperm.xlu0 %474, %v412
        %v476 = vpop.permute.xlu0 %475
        %477 = vset.pattern.permute.xlu0 0
        %478 = vperm.xlu0 %477, %v413
        %v479 = vpop.permute.xlu0 %478
        %480 = vset.pattern.permute.xlu0 0
        %481 = vperm.xlu0 %480, %v414
        %v482 = vpop.permute.xlu0 %481
        %483 = vset.pattern.permute.xlu0 0
        %484 = vperm.xlu0 %483, %v415
        %v485 = vpop.permute.xlu0 %484
        %486 = vset.pattern.permute.xlu0 0
        %487 = vperm.xlu0 %486, %v416
        %v488 = vpop.permute.xlu0 %487
        %489 = vset.pattern.permute.xlu0 0
        %490 = vperm.xlu0 %489, %v417
        %v491 = vpop.permute.xlu0 %490
        %492 = vset.pattern.permute.xlu0 0
        %493 = vperm.xlu0 %492, %v418
        %v494 = vpop.permute.xlu0 %493
        %495 = vset.pattern.permute.xlu0 0
        %496 = vperm.xlu0 %495, %v419
        %v497 = vpop.permute.xlu0 %496
        %498 = vset.pattern.permute.xlu0 0
        %499 = vperm.xlu0 %498, %v420
        %v500 = vpop.permute.xlu0 %499
        %501 = vset.pattern.permute.xlu0 0
        %502 = vperm.xlu0 %501, %v421
        %v503 = vpop.permute.xlu0 %502
        %504 = vset.pattern.permute.xlu0 0
        %505 = vperm.xlu0 %504, %v422
        %v506 = vpop.permute.xlu0 %505
        %507 = vset.pattern.permute.xlu0 0
        %508 = vperm.xlu0 %507, %v423
        %v509 = vpop.permute.xlu0 %508
        %510 = vset.pattern.permute.xlu0 0
        %511 = vperm.xlu0 %510, %v424
        %v512 = vpop.permute.xlu0 %511
        %513 = vset.pattern.permute.xlu0 0
        %514 = vperm.xlu0 %513, %v425
        %v515 = vpop.permute.xlu0 %514
        %516 = vset.pattern.permute.xlu0 0
        %517 = vperm.xlu0 %516, %v426
        %v518 = vpop.permute.xlu0 %517
        %519 = vset.pattern.permute.xlu0 0
        %520 = vperm.xlu0 %519, %v427
        %v521 = vpop.permute.xlu0 %520
        %522 = vset.pattern.permute.xlu0 0
        %523 = vperm.xlu0 %522, %v428
        %v524 = vpop.permute.xlu0 %523
        %525 = vset.pattern.permute.xlu0 0
        %526 = vperm.xlu0 %525, %v429
        %v527 = vpop.permute.xlu0 %526
        %vm528 = vcmp.eq.s32.totalorder %v434, %v431
        %vm529 = vcmp.eq.s32.totalorder %v437, %v431
        %vm530 = vcmp.eq.s32.totalorder %v440, %v431
        %vm531 = vcmp.eq.s32.totalorder %v443, %v431
        %vm532 = vcmp.eq.s32.totalorder %v446, %v431
        %vm533 = vcmp.eq.s32.totalorder %v449, %v431
        %vm534 = vcmp.eq.s32.totalorder %v452, %v431
        %vm535 = vcmp.eq.s32.totalorder %v455, %v431
        %vm536 = vcmp.eq.s32.totalorder %v458, %v431
        %vm537 = vcmp.eq.s32.totalorder %v461, %v431
        %vm538 = vcmp.eq.s32.totalorder %v464, %v431
        %vm539 = vcmp.eq.s32.totalorder %v467, %v431
        %vm540 = vcmp.eq.s32.totalorder %v470, %v431
        %vm541 = vcmp.eq.s32.totalorder %v473, %v431
        %vm542 = vcmp.eq.s32.totalorder %v476, %v431
        %vm543 = vcmp.eq.s32.totalorder %v479, %v431
        %vm544 = vcmp.eq.s32.totalorder %v482, %v431
        %vm545 = vcmp.eq.s32.totalorder %v485, %v431
        %vm546 = vcmp.eq.s32.totalorder %v488, %v431
        %vm547 = vcmp.eq.s32.totalorder %v491, %v431
        %vm548 = vcmp.eq.s32.totalorder %v494, %v431
        %vm549 = vcmp.eq.s32.totalorder %v497, %v431
        %vm550 = vcmp.eq.s32.totalorder %v500, %v431
        %vm551 = vcmp.eq.s32.totalorder %v503, %v431
        %vm552 = vcmp.eq.s32.totalorder %v506, %v431
        %vm553 = vcmp.eq.s32.totalorder %v509, %v431
        %vm554 = vcmp.eq.s32.totalorder %v512, %v431
        %vm555 = vcmp.eq.s32.totalorder %v515, %v431
        %vm556 = vcmp.eq.s32.totalorder %v518, %v431
        %vm557 = vcmp.eq.s32.totalorder %v521, %v431
        %vm558 = vcmp.eq.s32.totalorder %v524, %v431
        %vm559 = vcmp.eq.s32.totalorder %v527, %v431
        %v560 = vsel %vm528, 1, 0
        %v561 = vsel %vm529, 1, 0
        %v562 = vsel %vm530, 1, 0
        %v563 = vsel %vm531, 1, 0
        %v564 = vsel %vm532, 1, 0
        %v565 = vsel %vm533, 1, 0
        %v566 = vsel %vm534, 1, 0
        %v567 = vsel %vm535, 1, 0
        %v568 = vsel %vm536, 1, 0
        %v569 = vsel %vm537, 1, 0
        %v570 = vsel %vm538, 1, 0
        %v571 = vsel %vm539, 1, 0
        %v572 = vsel %vm540, 1, 0
        %v573 = vsel %vm541, 1, 0
        %v574 = vsel %vm542, 1, 0
        %v575 = vsel %vm543, 1, 0
        %v576 = vsel %vm544, 1, 0
        %v577 = vsel %vm545, 1, 0
        %v578 = vsel %vm546, 1, 0
        %v579 = vsel %vm547, 1, 0
        %v580 = vsel %vm548, 1, 0
        %v581 = vsel %vm549, 1, 0
        %v582 = vsel %vm550, 1, 0
        %v583 = vsel %vm551, 1, 0
        %v584 = vsel %vm552, 1, 0
        %v585 = vsel %vm553, 1, 0
        %v586 = vsel %vm554, 1, 0
        %v587 = vsel %vm555, 1, 0
        %v588 = vsel %vm556, 1, 0
        %v589 = vsel %vm557, 1, 0
        %v590 = vsel %vm558, 1, 0
        %v591 = vsel %vm559, 1, 0
        %v592 = vcvt.s32.f32 %v560
        %v593 = vcvt.s32.f32 %v561
        %v594 = vcvt.s32.f32 %v562
        %v595 = vcvt.s32.f32 %v563
        %v596 = vcvt.s32.f32 %v564
        %v597 = vcvt.s32.f32 %v565
        %v598 = vcvt.s32.f32 %v566
        %v599 = vcvt.s32.f32 %v567
        %v600 = vcvt.s32.f32 %v568
        %v601 = vcvt.s32.f32 %v569
        %v602 = vcvt.s32.f32 %v570
        %v603 = vcvt.s32.f32 %v571
        %v604 = vcvt.s32.f32 %v572
        %v605 = vcvt.s32.f32 %v573
        %v606 = vcvt.s32.f32 %v574
        %v607 = vcvt.s32.f32 %v575
        %v608 = vcvt.s32.f32 %v576
        %v609 = vcvt.s32.f32 %v577
        %v610 = vcvt.s32.f32 %v578
        %v611 = vcvt.s32.f32 %v579
        %v612 = vcvt.s32.f32 %v580
        %v613 = vcvt.s32.f32 %v581
        %v614 = vcvt.s32.f32 %v582
        %v615 = vcvt.s32.f32 %v583
        %v616 = vcvt.s32.f32 %v584
        %v617 = vcvt.s32.f32 %v585
        %v618 = vcvt.s32.f32 %v586
        %v619 = vcvt.s32.f32 %v587
        %v620 = vcvt.s32.f32 %v588
        %v621 = vcvt.s32.f32 %v589
        %v622 = vcvt.s32.f32 %v590
        %v623 = vcvt.s32.f32 %v591
        %v624 = vpack.c.bf16 %v593, %v592
        %v625 = vpack.c.bf16 %v595, %v594
        %v626 = vpack.c.bf16 %v597, %v596
        %v627 = vpack.c.bf16 %v599, %v598
        %v628 = vpack.c.bf16 %v601, %v600
        %v629 = vpack.c.bf16 %v603, %v602
        %v630 = vpack.c.bf16 %v605, %v604
        %v631 = vpack.c.bf16 %v607, %v606
        %v632 = vpack.c.bf16 %v609, %v608
        %v633 = vpack.c.bf16 %v611, %v610
        %v634 = vpack.c.bf16 %v613, %v612
        %v635 = vpack.c.bf16 %v615, %v614
        %v636 = vpack.c.bf16 %v617, %v616
        %v637 = vpack.c.bf16 %v619, %v618
        %v638 = vpack.c.bf16 %v621, %v620
        %v639 = vpack.c.bf16 %v623, %v622
        %v640 = vld [vmem:[#allocation2] sm:$0xff]
        %v641 = vld [vmem:[#allocation2 + $0x8] sm:$0xff]
        %v642 = vld [vmem:[#allocation2 + $0x10] sm:$0xff]
        %v643 = vld [vmem:[#allocation2 + $0x18] sm:$0xff]
        %v644 = vld [vmem:[#allocation2 + $0x20] sm:$0xff]
        %v645 = vld [vmem:[#allocation2 + $0x28] sm:$0xff]
        %v646 = vld [vmem:[#allocation2 + $0x30] sm:$0xff]
        %v647 = vld [vmem:[#allocation2 + $0x38] sm:$0xff]
        %v648 = vld [vmem:[#allocation2 + $0x40] sm:$0xff]
        %v649 = vld [vmem:[#allocation2 + $0x48] sm:$0xff]
        %v650 = vld [vmem:[#allocation2 + $0x50] sm:$0xff]
        %v651 = vld [vmem:[#allocation2 + $0x58] sm:$0xff]
        %v652 = vld [vmem:[#allocation2 + $0x60] sm:$0xff]
        %v653 = vld [vmem:[#allocation2 + $0x68] sm:$0xff]
        %v654 = vld [vmem:[#allocation2 + $0x70] sm:$0xff]
        %v655 = vld [vmem:[#allocation2 + $0x78] sm:$0xff]
        %v656 = vld [vmem:[#allocation2 + $0x80] sm:$0xff]
        %v657 = vld [vmem:[#allocation2 + $0x88] sm:$0xff]
        %v658 = vld [vmem:[#allocation2 + $0x90] sm:$0xff]
        %v659 = vld [vmem:[#allocation2 + $0x98] sm:$0xff]
        %v660 = vld [vmem:[#allocation2 + $0xa0] sm:$0xff]
        %v661 = vld [vmem:[#allocation2 + $0xa8] sm:$0xff]
        %v662 = vld [vmem:[#allocation2 + $0xb0] sm:$0xff]
        %v663 = vld [vmem:[#allocation2 + $0xb8] sm:$0xff]
        %v664 = vld [vmem:[#allocation2 + $0xc0] sm:$0xff]
        %v665 = vld [vmem:[#allocation2 + $0xc8] sm:$0xff]
        %v666 = vld [vmem:[#allocation2 + $0xd0] sm:$0xff]
        %v667 = vld [vmem:[#allocation2 + $0xd8] sm:$0xff]
        %v668 = vld [vmem:[#allocation2 + $0xe0] sm:$0xff]
        %v669 = vld [vmem:[#allocation2 + $0xe8] sm:$0xff]
        %v670 = vld [vmem:[#allocation2 + $0xf0] sm:$0xff]
        %v671 = vld [vmem:[#allocation2 + $0xf8] sm:$0xff]
        %v672 = vld [vmem:[%s3] sm:$0x3]
        %v674 = vlaneseq
        %v675 = vshrl.u32 %v674, 7
        %v676 = vsub.s32 0, %v675
        %v677 = vrot.slane %v672, %v676
        %v678 = vlaneseq
        %v679 = vshrl.u32 %v678, 7
        %v680 = vsub.s32 1, %v679
        %v681 = vrot.slane %v672, %v680
        %v716 = vunpack.c.l.b16 %v640
        %v717 = vunpack.c.h.b16 %v640
        %v718 = vunpack.c.l.b16 %v641
        %v719 = vunpack.c.h.b16 %v641
        %v720 = vunpack.c.l.b16 %v642
        %v721 = vunpack.c.h.b16 %v642
        %v722 = vunpack.c.l.b16 %v643
        %v723 = vunpack.c.h.b16 %v643
        %v724 = vunpack.c.l.b16 %v644
        %v725 = vunpack.c.h.b16 %v644
        %v726 = vunpack.c.l.b16 %v645
        %v727 = vunpack.c.h.b16 %v645
        %v728 = vunpack.c.l.b16 %v646
        %v729 = vunpack.c.h.b16 %v646
        %v730 = vunpack.c.l.b16 %v647
        %v731 = vunpack.c.h.b16 %v647
        %v732 = vunpack.c.l.b16 %v648
        %v733 = vunpack.c.h.b16 %v648
        %v734 = vunpack.c.l.b16 %v649
        %v735 = vunpack.c.h.b16 %v649
        %v736 = vunpack.c.l.b16 %v650
        %v737 = vunpack.c.h.b16 %v650
        %v738 = vunpack.c.l.b16 %v651
        %v739 = vunpack.c.h.b16 %v651
        %v740 = vunpack.c.l.b16 %v652
        %v741 = vunpack.c.h.b16 %v652
        %v742 = vunpack.c.l.b16 %v653
        %v743 = vunpack.c.h.b16 %v653
        %v744 = vunpack.c.l.b16 %v654
        %v745 = vunpack.c.h.b16 %v654
        %v746 = vunpack.c.l.b16 %v655
        %v747 = vunpack.c.h.b16 %v655
        %v748 = vunpack.c.l.b16 %v656
        %v749 = vunpack.c.h.b16 %v656
        %v750 = vunpack.c.l.b16 %v657
        %v751 = vunpack.c.h.b16 %v657
        %v752 = vunpack.c.l.b16 %v658
        %v753 = vunpack.c.h.b16 %v658
        %v754 = vunpack.c.l.b16 %v659
        %v755 = vunpack.c.h.b16 %v659
        %v756 = vunpack.c.l.b16 %v660
        %v757 = vunpack.c.h.b16 %v660
        %v758 = vunpack.c.l.b16 %v661
        %v759 = vunpack.c.h.b16 %v661
        %v760 = vunpack.c.l.b16 %v662
        %v761 = vunpack.c.h.b16 %v662
        %v762 = vunpack.c.l.b16 %v663
        %v763 = vunpack.c.h.b16 %v663
        %v764 = vunpack.c.l.b16 %v664
        %v765 = vunpack.c.h.b16 %v664
        %v766 = vunpack.c.l.b16 %v665
        %v767 = vunpack.c.h.b16 %v665
        %v768 = vunpack.c.l.b16 %v666
        %v769 = vunpack.c.h.b16 %v666
        %v770 = vunpack.c.l.b16 %v667
        %v771 = vunpack.c.h.b16 %v667
        %v772 = vunpack.c.l.b16 %v668
        %v773 = vunpack.c.h.b16 %v668
        %v774 = vunpack.c.l.b16 %v669
        %v775 = vunpack.c.h.b16 %v669
        %v776 = vunpack.c.l.b16 %v670
        %v777 = vunpack.c.h.b16 %v670
        %v778 = vunpack.c.l.b16 %v671
        %v779 = vunpack.c.h.b16 %v671
        %v780 = vpack.c.b16 %v718, %v716
        %v781 = vpack.c.b16 %v719, %v717
        %v782 = vpack.c.b16 %v722, %v720
        %v783 = vpack.c.b16 %v723, %v721
        %v784 = vpack.c.b16 %v726, %v724
        %v785 = vpack.c.b16 %v727, %v725
        %v786 = vpack.c.b16 %v730, %v728
        %v787 = vpack.c.b16 %v731, %v729
        %v788 = vpack.c.b16 %v734, %v732
        %v789 = vpack.c.b16 %v735, %v733
        %v790 = vpack.c.b16 %v738, %v736
        %v791 = vpack.c.b16 %v739, %v737
        %v792 = vpack.c.b16 %v742, %v740
        %v793 = vpack.c.b16 %v743, %v741
        %v794 = vpack.c.b16 %v746, %v744
        %v795 = vpack.c.b16 %v747, %v745
        %v796 = vpack.c.b16 %v750, %v748
        %v797 = vpack.c.b16 %v751, %v749
        %v798 = vpack.c.b16 %v754, %v752
        %v799 = vpack.c.b16 %v755, %v753
        %v800 = vpack.c.b16 %v758, %v756
        %v801 = vpack.c.b16 %v759, %v757
        %v802 = vpack.c.b16 %v762, %v760
        %v803 = vpack.c.b16 %v763, %v761
        %v804 = vpack.c.b16 %v766, %v764
        %v805 = vpack.c.b16 %v767, %v765
        %v806 = vpack.c.b16 %v770, %v768
        %v807 = vpack.c.b16 %v771, %v769
        %v808 = vpack.c.b16 %v774, %v772
        %v809 = vpack.c.b16 %v775, %v773
        %v810 = vpack.c.b16 %v778, %v776
        %v811 = vpack.c.b16 %v779, %v777
        %844 = vmatprep.subr.bf16.mxu0 %v781
        %845 = vmatpush1.bf16.msra.mxu0 %v780
        %846 = vmatprep.subr.bf16.mxu0 %v783
        %847 = vmatpush1.bf16.msra.mxu0 %v782
        %848 = vmatprep.subr.bf16.mxu0 %v785
        %849 = vmatpush1.bf16.msra.mxu0 %v784
        %850 = vmatprep.subr.bf16.mxu0 %v787
        %851 = vmatpush1.bf16.msra.mxu0 %v786
        %852 = vmatprep.subr.bf16.mxu0 %v789
        %853 = vmatpush1.bf16.msra.mxu0 %v788
        %854 = vmatprep.subr.bf16.mxu0 %v791
        %855 = vmatpush1.bf16.msra.mxu0 %v790
        %856 = vmatprep.subr.bf16.mxu0 %v793
        %857 = vmatpush1.bf16.msra.mxu0 %v792
        %858 = vmatprep.subr.bf16.mxu0 %v795
        %859 = vmatpush1.bf16.msra.mxu0 %v794
        %860 = vmatprep.subr.bf16.mxu0 %v797
        %861 = vmatpush1.bf16.msra.mxu0 %v796
        %862 = vmatprep.subr.bf16.mxu0 %v799
        %863 = vmatpush1.bf16.msra.mxu0 %v798
        %864 = vmatprep.subr.bf16.mxu0 %v801
        %865 = vmatpush1.bf16.msra.mxu0 %v800
        %866 = vmatprep.subr.bf16.mxu0 %v803
        %867 = vmatpush1.bf16.msra.mxu0 %v802
        %868 = vmatprep.subr.bf16.mxu0 %v805
        %869 = vmatpush1.bf16.msra.mxu0 %v804
        %870 = vmatprep.subr.bf16.mxu0 %v807
        %871 = vmatpush1.bf16.msra.mxu0 %v806
        %872 = vmatprep.subr.bf16.mxu0 %v809
        %873 = vmatpush1.bf16.msra.mxu0 %v808
        %874 = vmatprep.subr.bf16.mxu0 %v811
        %875 = vmatpush1.bf16.msra.mxu0 %v810
        %876 = vmatprep.mubr.bf16.mxu0 %v624
        %877 = vmatmul.mubr.bf16.gmra.mrb[0].mxu0 %v382
        %v878 = vpop.f32.mrb[0].mxu0
        %v879 = vadd.f32 %v677, %v878
        %v880 = vpop.f32.mrb[0].mxu0
        %v881 = vadd.f32 %v681, %v880
        %v882 = vpop.f32.mrb[0].mxu0
        %v883 = vadd.f32 %v677, %v882
        %v884 = vpop.f32.mrb[0].mxu0
        %v885 = vadd.f32 %v681, %v884
        %886 = vmatprep.mubr.bf16.mxu0 %v625
        %887 = vmatmul.mubr.bf16.gmra.mrb[0].mxu0 %v383
        %v888 = vpop.f32.mrb[0].mxu0
        %v889 = vadd.f32 %v677, %v888
        %v890 = vpop.f32.mrb[0].mxu0
        %v891 = vadd.f32 %v681, %v890
        %v892 = vpop.f32.mrb[0].mxu0
        %v893 = vadd.f32 %v677, %v892
        %v894 = vpop.f32.mrb[0].mxu0
        %v895 = vadd.f32 %v681, %v894
        %896 = vmatprep.mubr.bf16.mxu0 %v626
        %897 = vmatmul.mubr.bf16.gmra.mrb[0].mxu0 %v384
        %v898 = vpop.f32.mrb[0].mxu0
        %v899 = vadd.f32 %v677, %v898
        %v900 = vpop.f32.mrb[0].mxu0
        %v901 = vadd.f32 %v681, %v900
        %v902 = vpop.f32.mrb[0].mxu0
        %v903 = vadd.f32 %v677, %v902
        %v904 = vpop.f32.mrb[0].mxu0
        %v905 = vadd.f32 %v681, %v904
        %906 = vmatprep.mubr.bf16.mxu0 %v627
        %907 = vmatmul.mubr.bf16.gmra.mrb[0].mxu0 %v385
        %v908 = vpop.f32.mrb[0].mxu0
        %v909 = vadd.f32 %v677, %v908
        %v910 = vpop.f32.mrb[0].mxu0
        %v911 = vadd.f32 %v681, %v910
        %v912 = vpop.f32.mrb[0].mxu0
        %v913 = vadd.f32 %v677, %v912
        %v914 = vpop.f32.mrb[0].mxu0
        %v915 = vadd.f32 %v681, %v914
        %916 = vmatprep.mubr.bf16.mxu0 %v628
        %917 = vmatmul.mubr.bf16.gmra.mrb[0].mxu0 %v386
        %v918 = vpop.f32.mrb[0].mxu0
        %v919 = vadd.f32 %v677, %v918
        %v920 = vpop.f32.mrb[0].mxu0
        %v921 = vadd.f32 %v681, %v920
        %v922 = vpop.f32.mrb[0].mxu0
        %v923 = vadd.f32 %v677, %v922
        %v924 = vpop.f32.mrb[0].mxu0
        %v925 = vadd.f32 %v681, %v924
        %926 = vmatprep.mubr.bf16.mxu0 %v629
        %927 = vmatmul.mubr.bf16.gmra.mrb[0].mxu0 %v387
        %v928 = vpop.f32.mrb[0].mxu0
        %v929 = vadd.f32 %v677, %v928
        %v930 = vpop.f32.mrb[0].mxu0
        %v931 = vadd.f32 %v681, %v930
        %v932 = vpop.f32.mrb[0].mxu0
        %v933 = vadd.f32 %v677, %v932
        %v934 = vpop.f32.mrb[0].mxu0
        %v935 = vadd.f32 %v681, %v934
        %936 = vmatprep.mubr.bf16.mxu0 %v630
        %937 = vmatmul.mubr.bf16.gmra.mrb[0].mxu0 %v388
        %v938 = vpop.f32.mrb[0].mxu0
        %v939 = vadd.f32 %v677, %v938
        %v940 = vpop.f32.mrb[0].mxu0
        %v941 = vadd.f32 %v681, %v940
        %v942 = vpop.f32.mrb[0].mxu0
        %v943 = vadd.f32 %v677, %v942
        %v944 = vpop.f32.mrb[0].mxu0
        %v945 = vadd.f32 %v681, %v944
        %946 = vmatprep.mubr.bf16.mxu0 %v631
        %947 = vmatmul.mubr.bf16.gmra.mrb[0].mxu0 %v389
        %v948 = vpop.f32.mrb[0].mxu0
        %v949 = vadd.f32 %v677, %v948
        %v950 = vpop.f32.mrb[0].mxu0
        %v951 = vadd.f32 %v681, %v950
        %v952 = vpop.f32.mrb[0].mxu0
        %v953 = vadd.f32 %v677, %v952
        %v954 = vpop.f32.mrb[0].mxu0
        %v955 = vadd.f32 %v681, %v954
        %956 = vmatprep.mubr.bf16.mxu0 %v632
        %957 = vmatmul.mubr.bf16.gmra.mrb[0].mxu0 %v390
        %v958 = vpop.f32.mrb[0].mxu0
        %v959 = vadd.f32 %v677, %v958
        %v960 = vpop.f32.mrb[0].mxu0
        %v961 = vadd.f32 %v681, %v960
        %v962 = vpop.f32.mrb[0].mxu0
        %v963 = vadd.f32 %v677, %v962
        %v964 = vpop.f32.mrb[0].mxu0
        %v965 = vadd.f32 %v681, %v964
        %966 = vmatprep.mubr.bf16.mxu0 %v633
        %967 = vmatmul.mubr.bf16.gmra.mrb[0].mxu0 %v391
        %v968 = vpop.f32.mrb[0].mxu0
        %v969 = vadd.f32 %v677, %v968
        %v970 = vpop.f32.mrb[0].mxu0
        %v971 = vadd.f32 %v681, %v970
        %v972 = vpop.f32.mrb[0].mxu0
        %v973 = vadd.f32 %v677, %v972
        %v974 = vpop.f32.mrb[0].mxu0
        %v975 = vadd.f32 %v681, %v974
        %976 = vmatprep.mubr.bf16.mxu0 %v634
        %977 = vmatmul.mubr.bf16.gmra.mrb[0].mxu0 %v392
        %v978 = vpop.f32.mrb[0].mxu0
        %v979 = vadd.f32 %v677, %v978
        %v980 = vpop.f32.mrb[0].mxu0
        %v981 = vadd.f32 %v681, %v980
        %v982 = vpop.f32.mrb[0].mxu0
        %v983 = vadd.f32 %v677, %v982
        %v984 = vpop.f32.mrb[0].mxu0
        %v985 = vadd.f32 %v681, %v984
        %986 = vmatprep.mubr.bf16.mxu0 %v635
        %987 = vmatmul.mubr.bf16.gmra.mrb[0].mxu0 %v393
        %v988 = vpop.f32.mrb[0].mxu0
        %v989 = vadd.f32 %v677, %v988
        %v990 = vpop.f32.mrb[0].mxu0
        %v991 = vadd.f32 %v681, %v990
        %v992 = vpop.f32.mrb[0].mxu0
        %v993 = vadd.f32 %v677, %v992
        %v994 = vpop.f32.mrb[0].mxu0
        %v995 = vadd.f32 %v681, %v994
        %996 = vmatprep.mubr.bf16.mxu0 %v636
        %997 = vmatmul.mubr.bf16.gmra.mrb[0].mxu0 %v394
        %v998 = vpop.f32.mrb[0].mxu0
        %v999 = vadd.f32 %v677, %v998
        %v1000 = vpop.f32.mrb[0].mxu0
        %v1001 = vadd.f32 %v681, %v1000
        %v1002 = vpop.f32.mrb[0].mxu0
        %v1003 = vadd.f32 %v677, %v1002
        %v1004 = vpop.f32.mrb[0].mxu0
        %v1005 = vadd.f32 %v681, %v1004
        %1006 = vmatprep.mubr.bf16.mxu0 %v637
        %1007 = vmatmul.mubr.bf16.gmra.mrb[0].mxu0 %v395
        %v1008 = vpop.f32.mrb[0].mxu0
        %v1009 = vadd.f32 %v677, %v1008
        %v1010 = vpop.f32.mrb[0].mxu0
        %v1011 = vadd.f32 %v681, %v1010
        %v1012 = vpop.f32.mrb[0].mxu0
        %v1013 = vadd.f32 %v677, %v1012
        %v1014 = vpop.f32.mrb[0].mxu0
        %v1015 = vadd.f32 %v681, %v1014
        %1016 = vmatprep.mubr.bf16.mxu0 %v638
        %1017 = vmatmul.mubr.bf16.gmra.mrb[0].mxu0 %v396
        %v1018 = vpop.f32.mrb[0].mxu0
        %v1019 = vadd.f32 %v677, %v1018
        %v1020 = vpop.f32.mrb[0].mxu0
        %v1021 = vadd.f32 %v681, %v1020
        %v1022 = vpop.f32.mrb[0].mxu0
        %v1023 = vadd.f32 %v677, %v1022
        %v1024 = vpop.f32.mrb[0].mxu0
        %v1025 = vadd.f32 %v681, %v1024
        %1026 = vmatprep.mubr.bf16.mxu0 %v639
        %1027 = vmatmul.mubr.bf16.gmra.mrb[0].mxu0 %v397
        %v1028 = vpop.f32.mrb[0].mxu0
        %v1029 = vadd.f32 %v677, %v1028
        %v1030 = vpop.f32.mrb[0].mxu0
        %v1031 = vadd.f32 %v681, %v1030
        %v1032 = vpop.f32.mrb[0].mxu0
        %v1033 = vadd.f32 %v677, %v1032
        %v1034 = vpop.f32.mrb[0].mxu0
        %v1035 = vadd.f32 %v681, %v1034
        %1036 = vdwg.mxu0
        %v1037 = vmax.f32 %v879, 0.0
        %v1038 = vmax.f32 %v881, 0.0
        %v1039 = vmax.f32 %v883, 0.0
        %v1040 = vmax.f32 %v885, 0.0
        %v1041 = vmax.f32 %v889, 0.0
        %v1042 = vmax.f32 %v891, 0.0
        %v1043 = vmax.f32 %v893, 0.0
        %v1044 = vmax.f32 %v895, 0.0
        %v1045 = vmax.f32 %v899, 0.0
        %v1046 = vmax.f32 %v901, 0.0
        %v1047 = vmax.f32 %v903, 0.0
        %v1048 = vmax.f32 %v905, 0.0
        %v1049 = vmax.f32 %v909, 0.0
        %v1050 = vmax.f32 %v911, 0.0
        %v1051 = vmax.f32 %v913, 0.0
        %v1052 = vmax.f32 %v915, 0.0
        %v1053 = vmax.f32 %v919, 0.0
        %v1054 = vmax.f32 %v921, 0.0
        %v1055 = vmax.f32 %v923, 0.0
        %v1056 = vmax.f32 %v925, 0.0
        %v1057 = vmax.f32 %v929, 0.0
        %v1058 = vmax.f32 %v931, 0.0
        %v1059 = vmax.f32 %v933, 0.0
        %v1060 = vmax.f32 %v935, 0.0
        %v1061 = vmax.f32 %v939, 0.0
        %v1062 = vmax.f32 %v941, 0.0
        %v1063 = vmax.f32 %v943, 0.0
        %v1064 = vmax.f32 %v945, 0.0
        %v1065 = vmax.f32 %v949, 0.0
        %v1066 = vmax.f32 %v951, 0.0
        %v1067 = vmax.f32 %v953, 0.0
        %v1068 = vmax.f32 %v955, 0.0
        %v1069 = vmax.f32 %v959, 0.0
        %v1070 = vmax.f32 %v961, 0.0
        %v1071 = vmax.f32 %v963, 0.0
        %v1072 = vmax.f32 %v965, 0.0
        %v1073 = vmax.f32 %v969, 0.0
        %v1074 = vmax.f32 %v971, 0.0
        %v1075 = vmax.f32 %v973, 0.0
        %v1076 = vmax.f32 %v975, 0.0
        %v1077 = vmax.f32 %v979, 0.0
        %v1078 = vmax.f32 %v981, 0.0
        %v1079 = vmax.f32 %v983, 0.0
        %v1080 = vmax.f32 %v985, 0.0
        %v1081 = vmax.f32 %v989, 0.0
        %v1082 = vmax.f32 %v991, 0.0
        %v1083 = vmax.f32 %v993, 0.0
        %v1084 = vmax.f32 %v995, 0.0
        %v1085 = vmax.f32 %v999, 0.0
        %v1086 = vmax.f32 %v1001, 0.0
        %v1087 = vmax.f32 %v1003, 0.0
        %v1088 = vmax.f32 %v1005, 0.0
        %v1089 = vmax.f32 %v1009, 0.0
        %v1090 = vmax.f32 %v1011, 0.0
        %v1091 = vmax.f32 %v1013, 0.0
        %v1092 = vmax.f32 %v1015, 0.0
        %v1093 = vmax.f32 %v1019, 0.0
        %v1094 = vmax.f32 %v1021, 0.0
        %v1095 = vmax.f32 %v1023, 0.0
        %v1096 = vmax.f32 %v1025, 0.0
        %v1097 = vmax.f32 %v1029, 0.0
        %v1098 = vmax.f32 %v1031, 0.0
        %v1099 = vmax.f32 %v1033, 0.0
        %v1100 = vmax.f32 %v1035, 0.0
        %v1101 = vpack.c.bf16 %v1039, %v1037
        %v1102 = vpack.c.bf16 %v1040, %v1038
        %v1103 = vpack.c.bf16 %v1043, %v1041
        %v1104 = vpack.c.bf16 %v1044, %v1042
        %v1105 = vpack.c.bf16 %v1047, %v1045
        %v1106 = vpack.c.bf16 %v1048, %v1046
        %v1107 = vpack.c.bf16 %v1051, %v1049
        %v1108 = vpack.c.bf16 %v1052, %v1050
        %v1109 = vpack.c.bf16 %v1055, %v1053
        %v1110 = vpack.c.bf16 %v1056, %v1054
        %v1111 = vpack.c.bf16 %v1059, %v1057
        %v1112 = vpack.c.bf16 %v1060, %v1058
        %v1113 = vpack.c.bf16 %v1063, %v1061
        %v1114 = vpack.c.bf16 %v1064, %v1062
        %v1115 = vpack.c.bf16 %v1067, %v1065
        %v1116 = vpack.c.bf16 %v1068, %v1066
        %v1117 = vpack.c.bf16 %v1071, %v1069
        %v1118 = vpack.c.bf16 %v1072, %v1070
        %v1119 = vpack.c.bf16 %v1075, %v1073
        %v1120 = vpack.c.bf16 %v1076, %v1074
        %v1121 = vpack.c.bf16 %v1079, %v1077
        %v1122 = vpack.c.bf16 %v1080, %v1078
        %v1123 = vpack.c.bf16 %v1083, %v1081
        %v1124 = vpack.c.bf16 %v1084, %v1082
        %v1125 = vpack.c.bf16 %v1087, %v1085
        %v1126 = vpack.c.bf16 %v1088, %v1086
        %v1127 = vpack.c.bf16 %v1091, %v1089
        %v1128 = vpack.c.bf16 %v1092, %v1090
        %v1129 = vpack.c.bf16 %v1095, %v1093
        %v1130 = vpack.c.bf16 %v1096, %v1094
        %v1131 = vpack.c.bf16 %v1099, %v1097
        %v1132 = vpack.c.bf16 %v1100, %v1098
        %v1133 = vld [vmem:[#allocation5] sm:$0xf]
        %v1134 = vld [vmem:[#allocation5 + $0x4] sm:$0xf]
        %v1135 = vld [vmem:[#allocation5 + $0x8] sm:$0xf]
        %v1136 = vld [vmem:[#allocation5 + $0xc] sm:$0xf]
        %v1137 = vld [vmem:[#allocation5 + $0x10] sm:$0xf]
        %v1138 = vld [vmem:[#allocation5 + $0x14] sm:$0xf]
        %v1139 = vld [vmem:[#allocation5 + $0x18] sm:$0xf]
        %v1140 = vld [vmem:[#allocation5 + $0x1c] sm:$0xf]
        %v1141 = vld [vmem:[#allocation5 + $0x20] sm:$0xf]
        %v1142 = vld [vmem:[#allocation5 + $0x24] sm:$0xf]
        %v1143 = vld [vmem:[#allocation5 + $0x28] sm:$0xf]
        %v1144 = vld [vmem:[#allocation5 + $0x2c] sm:$0xf]
        %v1145 = vld [vmem:[#allocation5 + $0x30] sm:$0xf]
        %v1146 = vld [vmem:[#allocation5 + $0x34] sm:$0xf]
        %v1147 = vld [vmem:[#allocation5 + $0x38] sm:$0xf]
        %v1148 = vld [vmem:[#allocation5 + $0x3c] sm:$0xf]
        %v1149 = vld [vmem:[#allocation5 + $0x40] sm:$0xf]
        %v1150 = vld [vmem:[#allocation5 + $0x44] sm:$0xf]
        %v1151 = vld [vmem:[#allocation5 + $0x48] sm:$0xf]
        %v1152 = vld [vmem:[#allocation5 + $0x4c] sm:$0xf]
        %v1153 = vld [vmem:[#allocation5 + $0x50] sm:$0xf]
        %v1154 = vld [vmem:[#allocation5 + $0x54] sm:$0xf]
        %v1155 = vld [vmem:[#allocation5 + $0x58] sm:$0xf]
        %v1156 = vld [vmem:[#allocation5 + $0x5c] sm:$0xf]
        %v1157 = vld [vmem:[#allocation5 + $0x60] sm:$0xf]
        %v1158 = vld [vmem:[#allocation5 + $0x64] sm:$0xf]
        %v1159 = vld [vmem:[#allocation5 + $0x68] sm:$0xf]
        %v1160 = vld [vmem:[#allocation5 + $0x6c] sm:$0xf]
        %v1161 = vld [vmem:[#allocation5 + $0x70] sm:$0xf]
        %v1162 = vld [vmem:[#allocation5 + $0x74] sm:$0xf]
        %v1163 = vld [vmem:[#allocation5 + $0x78] sm:$0xf]
        %v1164 = vld [vmem:[#allocation5 + $0x7c] sm:$0xf]
        %v1165 = vld [vmem:[%s5] sm:$0x1]
        %v1167 = vlaneseq
        %v1168 = vshrl.u32 %v1167, 7
        %v1169 = vsub.s32 0, %v1168
        %v1170 = vrot.slane %v1165, %v1169
        %v1204 = vunpack.c.l.b16 %v1133
        %v1205 = vunpack.c.l.b16 %v1134
        %v1206 = vunpack.c.l.b16 %v1135
        %v1207 = vunpack.c.l.b16 %v1136
        %v1208 = vunpack.c.l.b16 %v1137
        %v1209 = vunpack.c.l.b16 %v1138
        %v1210 = vunpack.c.l.b16 %v1139
        %v1211 = vunpack.c.l.b16 %v1140
        %v1212 = vunpack.c.l.b16 %v1141
        %v1213 = vunpack.c.l.b16 %v1142
        %v1214 = vunpack.c.l.b16 %v1143
        %v1215 = vunpack.c.l.b16 %v1144
        %v1216 = vunpack.c.l.b16 %v1145
        %v1217 = vunpack.c.l.b16 %v1146
        %v1218 = vunpack.c.l.b16 %v1147
        %v1219 = vunpack.c.l.b16 %v1148
        %v1220 = vunpack.c.l.b16 %v1149
        %v1221 = vunpack.c.l.b16 %v1150
        %v1222 = vunpack.c.l.b16 %v1151
        %v1223 = vunpack.c.l.b16 %v1152
        %v1224 = vunpack.c.l.b16 %v1153
        %v1225 = vunpack.c.l.b16 %v1154
        %v1226 = vunpack.c.l.b16 %v1155
        %v1227 = vunpack.c.l.b16 %v1156
        %v1228 = vunpack.c.l.b16 %v1157
        %v1229 = vunpack.c.l.b16 %v1158
        %v1230 = vunpack.c.l.b16 %v1159
        %v1231 = vunpack.c.l.b16 %v1160
        %v1232 = vunpack.c.l.b16 %v1161
        %v1233 = vunpack.c.l.b16 %v1162
        %v1234 = vunpack.c.l.b16 %v1163
        %v1235 = vunpack.c.l.b16 %v1164
        %v1236 = vpack.c.b16 %v1205, %v1204
        %v1237 = vpack.c.b16 %v1207, %v1206
        %v1238 = vpack.c.b16 %v1209, %v1208
        %v1239 = vpack.c.b16 %v1211, %v1210
        %v1240 = vpack.c.b16 %v1213, %v1212
        %v1241 = vpack.c.b16 %v1215, %v1214
        %v1242 = vpack.c.b16 %v1217, %v1216
        %v1243 = vpack.c.b16 %v1219, %v1218
        %v1244 = vpack.c.b16 %v1221, %v1220
        %v1245 = vpack.c.b16 %v1223, %v1222
        %v1246 = vpack.c.b16 %v1225, %v1224
        %v1247 = vpack.c.b16 %v1227, %v1226
        %v1248 = vpack.c.b16 %v1229, %v1228
        %v1249 = vpack.c.b16 %v1231, %v1230
        %v1250 = vpack.c.b16 %v1233, %v1232
        %v1251 = vpack.c.b16 %v1235, %v1234
        %1268 = vmatprep.subr.bf16.mxu0 0
        %1269 = vmatpush1.bf16.msra.mxu0 %v1236
        %1270 = vmatprep.subr.bf16.mxu0 0
        %1271 = vmatpush1.bf16.msra.mxu0 %v1237
        %1272 = vmatprep.subr.bf16.mxu0 0
        %1273 = vmatpush1.bf16.msra.mxu0 %v1238
        %1274 = vmatprep.subr.bf16.mxu0 0
        %1275 = vmatpush1.bf16.msra.mxu0 %v1239
        %1276 = vmatprep.subr.bf16.mxu0 0
        %1277 = vmatpush1.bf16.msra.mxu0 %v1240
        %1278 = vmatprep.subr.bf16.mxu0 0
        %1279 = vmatpush1.bf16.msra.mxu0 %v1241
        %1280 = vmatprep.subr.bf16.mxu0 0
        %1281 = vmatpush1.bf16.msra.mxu0 %v1242
        %1282 = vmatprep.subr.bf16.mxu0 0
        %1283 = vmatpush1.bf16.msra.mxu0 %v1243
        %1284 = vmatprep.subr.bf16.mxu0 0
        %1285 = vmatpush1.bf16.msra.mxu0 %v1244
        %1286 = vmatprep.subr.bf16.mxu0 0
        %1287 = vmatpush1.bf16.msra.mxu0 %v1245
        %1288 = vmatprep.subr.bf16.mxu0 0
        %1289 = vmatpush1.bf16.msra.mxu0 %v1246
        %1290 = vmatprep.subr.bf16.mxu0 0
        %1291 = vmatpush1.bf16.msra.mxu0 %v1247
        %1292 = vmatprep.subr.bf16.mxu0 0
        %1293 = vmatpush1.bf16.msra.mxu0 %v1248
        %1294 = vmatprep.subr.bf16.mxu0 0
        %1295 = vmatpush1.bf16.msra.mxu0 %v1249
        %1296 = vmatprep.subr.bf16.mxu0 0
        %1297 = vmatpush1.bf16.msra.mxu0 %v1250
        %1298 = vmatprep.subr.bf16.mxu0 0
        %1299 = vmatpush1.bf16.msra.mxu0 %v1251
        %1300 = vmatprep.mubr.bf16.mxu0 %v1102
        %1301 = vmatmul.mubr.bf16.gmra.mrb[0].mxu0 %v1101
        %v1302 = vpop.f32.mrb[0].mxu0
        %v1303 = vadd.f32 %v1170, %v1302
        %v1304 = vpop.f32.mrb[0].mxu0
        %v1305 = vpop.f32.mrb[0].mxu0
        %v1306 = vadd.f32 %v1170, %v1305
        %v1307 = vpop.f32.mrb[0].mxu0
        %1308 = vmatprep.mubr.bf16.mxu0 %v1104
        %1309 = vmatmul.mubr.bf16.gmra.mrb[0].mxu0 %v1103
        %v1310 = vpop.f32.mrb[0].mxu0
        %v1311 = vadd.f32 %v1170, %v1310
        %v1312 = vpop.f32.mrb[0].mxu0
        %v1313 = vpop.f32.mrb[0].mxu0
        %v1314 = vadd.f32 %v1170, %v1313
        %v1315 = vpop.f32.mrb[0].mxu0
        %1316 = vmatprep.mubr.bf16.mxu0 %v1106
        %1317 = vmatmul.mubr.bf16.gmra.mrb[0].mxu0 %v1105
        %v1318 = vpop.f32.mrb[0].mxu0
        %v1319 = vadd.f32 %v1170, %v1318
        %v1320 = vpop.f32.mrb[0].mxu0
        %v1321 = vpop.f32.mrb[0].mxu0
        %v1322 = vadd.f32 %v1170, %v1321
        %v1323 = vpop.f32.mrb[0].mxu0
        %1324 = vmatprep.mubr.bf16.mxu0 %v1108
        %1325 = vmatmul.mubr.bf16.gmra.mrb[0].mxu0 %v1107
        %v1326 = vpop.f32.mrb[0].mxu0
        %v1327 = vadd.f32 %v1170, %v1326
        %v1328 = vpop.f32.mrb[0].mxu0
        %v1329 = vpop.f32.mrb[0].mxu0
        %v1330 = vadd.f32 %v1170, %v1329
        %v1331 = vpop.f32.mrb[0].mxu0
        %1332 = vmatprep.mubr.bf16.mxu0 %v1110
        %1333 = vmatmul.mubr.bf16.gmra.mrb[0].mxu0 %v1109
        %v1334 = vpop.f32.mrb[0].mxu0
        %v1335 = vadd.f32 %v1170, %v1334
        %v1336 = vpop.f32.mrb[0].mxu0
        %v1337 = vpop.f32.mrb[0].mxu0
        %v1338 = vadd.f32 %v1170, %v1337
        %v1339 = vpop.f32.mrb[0].mxu0
        %1340 = vmatprep.mubr.bf16.mxu0 %v1112
        %1341 = vmatmul.mubr.bf16.gmra.mrb[0].mxu0 %v1111
        %v1342 = vpop.f32.mrb[0].mxu0
        %v1343 = vadd.f32 %v1170, %v1342
        %v1344 = vpop.f32.mrb[0].mxu0
        %v1345 = vpop.f32.mrb[0].mxu0
        %v1346 = vadd.f32 %v1170, %v1345
        %v1347 = vpop.f32.mrb[0].mxu0
        %1348 = vmatprep.mubr.bf16.mxu0 %v1114
        %1349 = vmatmul.mubr.bf16.gmra.mrb[0].mxu0 %v1113
        %v1350 = vpop.f32.mrb[0].mxu0
        %v1351 = vadd.f32 %v1170, %v1350
        %v1352 = vpop.f32.mrb[0].mxu0
        %v1353 = vpop.f32.mrb[0].mxu0
        %v1354 = vadd.f32 %v1170, %v1353
        %v1355 = vpop.f32.mrb[0].mxu0
        %1356 = vmatprep.mubr.bf16.mxu0 %v1116
        %1357 = vmatmul.mubr.bf16.gmra.mrb[0].mxu0 %v1115
        %v1358 = vpop.f32.mrb[0].mxu0
        %v1359 = vadd.f32 %v1170, %v1358
        %v1360 = vpop.f32.mrb[0].mxu0
        %v1361 = vpop.f32.mrb[0].mxu0
        %v1362 = vadd.f32 %v1170, %v1361
        %v1363 = vpop.f32.mrb[0].mxu0
        %1364 = vmatprep.mubr.bf16.mxu0 %v1118
        %1365 = vmatmul.mubr.bf16.gmra.mrb[0].mxu0 %v1117
        %v1366 = vpop.f32.mrb[0].mxu0
        %v1367 = vadd.f32 %v1170, %v1366
        %v1368 = vpop.f32.mrb[0].mxu0
        %v1369 = vpop.f32.mrb[0].mxu0
        %v1370 = vadd.f32 %v1170, %v1369
        %v1371 = vpop.f32.mrb[0].mxu0
        %1372 = vmatprep.mubr.bf16.mxu0 %v1120
        %1373 = vmatmul.mubr.bf16.gmra.mrb[0].mxu0 %v1119
        %v1374 = vpop.f32.mrb[0].mxu0
        %v1375 = vadd.f32 %v1170, %v1374
        %v1376 = vpop.f32.mrb[0].mxu0
        %v1377 = vpop.f32.mrb[0].mxu0
        %v1378 = vadd.f32 %v1170, %v1377
        %v1379 = vpop.f32.mrb[0].mxu0
        %1380 = vmatprep.mubr.bf16.mxu0 %v1122
        %1381 = vmatmul.mubr.bf16.gmra.mrb[0].mxu0 %v1121
        %v1382 = vpop.f32.mrb[0].mxu0
        %v1383 = vadd.f32 %v1170, %v1382
        %v1384 = vpop.f32.mrb[0].mxu0
        %v1385 = vpop.f32.mrb[0].mxu0
        %v1386 = vadd.f32 %v1170, %v1385
        %v1387 = vpop.f32.mrb[0].mxu0
        %1388 = vmatprep.mubr.bf16.mxu0 %v1124
        %1389 = vmatmul.mubr.bf16.gmra.mrb[0].mxu0 %v1123
        %v1390 = vpop.f32.mrb[0].mxu0
        %v1391 = vadd.f32 %v1170, %v1390
        %v1392 = vpop.f32.mrb[0].mxu0
        %v1393 = vpop.f32.mrb[0].mxu0
        %v1394 = vadd.f32 %v1170, %v1393
        %v1395 = vpop.f32.mrb[0].mxu0
        %1396 = vmatprep.mubr.bf16.mxu0 %v1126
        %1397 = vmatmul.mubr.bf16.gmra.mrb[0].mxu0 %v1125
        %v1398 = vpop.f32.mrb[0].mxu0
        %v1399 = vadd.f32 %v1170, %v1398
        %v1400 = vpop.f32.mrb[0].mxu0
        %v1401 = vpop.f32.mrb[0].mxu0
        %v1402 = vadd.f32 %v1170, %v1401
        %v1403 = vpop.f32.mrb[0].mxu0
        %1404 = vmatprep.mubr.bf16.mxu0 %v1128
        %1405 = vmatmul.mubr.bf16.gmra.mrb[0].mxu0 %v1127
        %v1406 = vpop.f32.mrb[0].mxu0
        %v1407 = vadd.f32 %v1170, %v1406
        %v1408 = vpop.f32.mrb[0].mxu0
        %v1409 = vpop.f32.mrb[0].mxu0
        %v1410 = vadd.f32 %v1170, %v1409
        %v1411 = vpop.f32.mrb[0].mxu0
        %1412 = vmatprep.mubr.bf16.mxu0 %v1130
        %1413 = vmatmul.mubr.bf16.gmra.mrb[0].mxu0 %v1129
        %v1414 = vpop.f32.mrb[0].mxu0
        %v1415 = vadd.f32 %v1170, %v1414
        %v1416 = vpop.f32.mrb[0].mxu0
        %v1417 = vpop.f32.mrb[0].mxu0
        %v1418 = vadd.f32 %v1170, %v1417
        %v1419 = vpop.f32.mrb[0].mxu0
        %1420 = vmatprep.mubr.bf16.mxu0 %v1132
        %1421 = vmatmul.mubr.bf16.gmra.mrb[0].mxu0 %v1131
        %v1422 = vpop.f32.mrb[0].mxu0
        %v1423 = vadd.f32 %v1170, %v1422
        %v1424 = vpop.f32.mrb[0].mxu0
        %v1425 = vpop.f32.mrb[0].mxu0
        %v1426 = vadd.f32 %v1170, %v1425
        %v1427 = vpop.f32.mrb[0].mxu0
        %1428 = vdwg.mxu0
        %1429 = vst [vmem:[%s315] sm:$0xff] %v1303
        %1430 = vst [vmem:[%s315 + $0x8] sm:$0xff] %v1306
        %1431 = vst [vmem:[%s315 + $0x10] sm:$0xff] %v1311
        %1432 = vst [vmem:[%s315 + $0x18] sm:$0xff] %v1314
        %1433 = vst [vmem:[%s315 + $0x20] sm:$0xff] %v1319
        %1434 = vst [vmem:[%s315 + $0x28] sm:$0xff] %v1322
        %1435 = vst [vmem:[%s315 + $0x30] sm:$0xff] %v1327
        %1436 = vst [vmem:[%s315 + $0x38] sm:$0xff] %v1330
        %1437 = vst [vmem:[%s315 + $0x40] sm:$0xff] %v1335
        %1438 = vst [vmem:[%s315 + $0x48] sm:$0xff] %v1338
        %1439 = vst [vmem:[%s315 + $0x50] sm:$0xff] %v1343
        %1440 = vst [vmem:[%s315 + $0x58] sm:$0xff] %v1346
        %1441 = vst [vmem:[%s315 + $0x60] sm:$0xff] %v1351
        %1442 = vst [vmem:[%s315 + $0x68] sm:$0xff] %v1354
        %1443 = vst [vmem:[%s315 + $0x70] sm:$0xff] %v1359
        %1444 = vst [vmem:[%s315 + $0x78] sm:$0xff] %v1362
        %1445 = vst [vmem:[%s315 + $0x80] sm:$0xff] %v1367
        %1446 = vst [vmem:[%s315 + $0x88] sm:$0xff] %v1370
        %1447 = vst [vmem:[%s315 + $0x90] sm:$0xff] %v1375
        %1448 = vst [vmem:[%s315 + $0x98] sm:$0xff] %v1378
        %1449 = vst [vmem:[%s315 + $0xa0] sm:$0xff] %v1383
        %1450 = vst [vmem:[%s315 + $0xa8] sm:$0xff] %v1386
        %1451 = vst [vmem:[%s315 + $0xb0] sm:$0xff] %v1391
        %1452 = vst [vmem:[%s315 + $0xb8] sm:$0xff] %v1394
        %1453 = vst [vmem:[%s315 + $0xc0] sm:$0xff] %v1399
        %1454 = vst [vmem:[%s315 + $0xc8] sm:$0xff] %v1402
        %1455 = vst [vmem:[%s315 + $0xd0] sm:$0xff] %v1407
        %1456 = vst [vmem:[%s315 + $0xd8] sm:$0xff] %v1410
        %1457 = vst [vmem:[%s315 + $0xe0] sm:$0xff] %v1415
        %1458 = vst [vmem:[%s315 + $0xe8] sm:$0xff] %v1418
        %1459 = vst [vmem:[%s315 + $0xf0] sm:$0xff] %v1423
        %1460 = vst [vmem:[%s315 + $0xf8] sm:$0xff] %v1426
        %s1461 = sand.u32 %s166, 1
        %s1462 = scalar_lea.sflag [#allocation4], %s1461
        %s1463 = sand.u32 %s166, 1
        %s1464 = smul.addr %s1463, 256
        %s1465 = scalar_lea.vmem [#allocation7], %s1464
        // Predicated region
        $region53: #{tpu_custom_call.1} parent=43 // pred_check
          %p1466 = pneg %p176
        $region54: #{tpu_custom_call.1} parent=43 // pred_check_branch
          %1468 = sbr.rel (%p1466) target = $region56
        $region55: #{tpu_custom_call.1} parent=43 // pred_region
          %s1469 = smul.u32 32, %s22
          %s1470 = ssub.s32 40, %s1469
          %p1471 = scmp.lt.s32.totalorder %s1470, 32
          %s1472 = scalar_select %p1471, %s1470, 32
          %s1473 = smul.u32 128, %s1472
          %s1475 = ssub.s32 4096, %s1473
          %1476 = vsyncadd %s1462, %s1475
          %p1477 = scmp.ne.s32.totalorder 0, %s1473
          %s1478 = smul.addr %s1469, 128
          %s1479 = scalar_lea.hbm %s6, %s1478
          %s1480 = smul.u32 8, %s1472
          %s1481 = sshll.u32 %s1465, 4
          %s1482 = int_to_ptr.vmem [resolvable:$true] %s1481
          %s1483 = sshll.u32 %s1480, 4
          %1487 = dma.vmem_to_hbm [thread:$0]  (%p1477), %s1482, %s1483, %s1479, %s1462, 128, 128, 8
        $region56: #{tpu_custom_call.1} parent=43 // pred_fallthru
          _
      $region44: #{tpu_custom_call.1} parent=5 // pred_fallthru
        _
      %p1488 = scmp.le.s32.totalorder 2, %s17
      // Predicated region
      $region57: #{tpu_custom_call.1} parent=5 // pred_check
        %p1489 = pneg %p1488
      $region58: #{tpu_custom_call.1} parent=5 // pred_check_branch
        %1491 = sbr.rel (%p1489) target = $region60
      $region59: #{tpu_custom_call.1} parent=5 // pred_region
        %s1492 = ssub.s32 %s17, 2
        // Predicated region
        $region61: #{tpu_custom_call.1} parent=59 // pred_check
          %p1493 = pneg %p182
        $region62: #{tpu_custom_call.1} parent=59 // pred_check_branch
          %1495 = sbr.rel (%p1493) target = $region64
        $region63: #{tpu_custom_call.1} parent=59 // pred_region
          %s1496 = sand.u32 %s167, 1
          %s1497 = scalar_lea.sflag [#allocation4], %s1496
          %s1498 = sand.u32 %s167, 1
          %s1499 = smul.addr %s1498, 256
          %s1500 = scalar_lea.vmem [#allocation7], %s1499
          %1501 = dma.done %s1497, 4096
        $region64: #{tpu_custom_call.1} parent=59 // pred_fallthru
          _
      $region60: #{tpu_custom_call.1} parent=5 // pred_fallthru
        _
    $region6: #{tpu_custom_call.1} parent=1 // loop_footer
      %s21 = sadd.s32 1, %s17
    $region7: #{tpu_custom_call.1} parent=1 // loop_footer_branch
      %16 = sbr.rel target = $region3
    $region8: #{tpu_custom_call.1} parent=1 // loop_exit
      _
    %1502 = vsyncpa [#allocation3], 1
    %s1503 = scalar_lea.sflag [#allocation3], 1
    %1504 = vsyncpa %s1503, 1
    %1505 = vsyncpa [#allocation6], 1
    %1506 = vsyncpa [#allocation4], 1
    %s1507 = scalar_lea.sflag [#allocation4], 1
    %1508 = vsyncpa %s1507, 1

</llo_original>
